<compile_context>
chip_gen: v7x
topology: tpu7x:2x2x1
jax: 0.10.0
libtpu: 0.0.40
codegen_flags: <defaults>
</compile_context>

<pallas_src>
import jax
import jax.numpy as jnp
from jax.experimental import pallas as pl
from jax.experimental.pallas import tpu as pltpu

IN_CHANN = 1
OUT_CH = 5          # conv out channels
KSIZE = 3           # conv kernel size
POOL = 10           # MaxPool1d(10)
L_OUT = 150         # pooled length (implied by H = 5*150)
L_IN = L_OUT * POOL # = 1500 input length
H = OUT_CH * L_OUT  # = 750
OUT_CLASSES = 2
WIN_ROWS = POOL + KSIZE - 1   # 12 taps per pool window (10 positions + k=3 halo)


def cnn_kernel(win_ref, cw_ref, cb_ref, w0_ref, w1_ref, lb_ref, out_ref):
    # win_ref: (12, TB, 150) VMEM -- win[j, b, p] = x_zeropad[b, 10*p + j]
    # cw_ref : (5, 3)  SMEM       -- conv weights (in_chann==1 squeezed)
    # cb_ref : (5,)    SMEM       -- conv bias
    # w0_ref : (5, 150) VMEM      -- L1 weights class 0: w0[o, p] = W[0, o*150 + p]
    # w1_ref : (5, 150) VMEM      -- L1 weights class 1
    # lb_ref : (1, 2)  VMEM       -- L1 bias
    # out_ref: (TB, 2) VMEM       -- softmax probabilities
    tb = out_ref.shape[0]

    # The 12 tap rows, each a lane-dense (TB, 150) slab; loaded once, reused by
    # all 5 conv output channels.
    rows = [win_ref[j] for j in range(WIN_ROWS)]

    w0 = w0_ref[...]                                   # (5, 150)
    w1 = w1_ref[...]                                   # (5, 150)

    acc0 = jnp.zeros((tb, L_OUT), jnp.float32)         # class-0 weighted features
    acc1 = jnp.zeros((tb, L_OUT), jnp.float32)         # class-1 weighted features

    for o in range(OUT_CH):
        k0 = cw_ref[o, 0]
        k1 = cw_ref[o, 1]
        k2 = cw_ref[o, 2]
        # Conv1d(k=3, pad=1) fused with MaxPool1d(10): running max over the 10
        # in-window positions; everything stays lane-dense (TB, 150).
        m = k0 * rows[0] + k1 * rows[1] + k2 * rows[2]
        for u in range(1, POOL):
            cu = k0 * rows[u] + k1 * rows[u + 1] + k2 * rows[u + 2]
            m = jnp.maximum(m, cu)
        # Bias is constant within a pool window -> add once post-max, then ReLU.
        pooled = jnp.maximum(m + cb_ref[o], 0.0)       # (TB, 150)
        # Linear contribution of this channel on the VPU (no tiny MXU dots).
        acc0 = acc0 + pooled * w0[o][None, :]
        acc1 = acc1 + pooled * w1[o][None, :]

    l0 = jnp.sum(acc0, axis=-1, keepdims=True)         # (TB, 1)
    l1 = jnp.sum(acc1, axis=-1, keepdims=True)         # (TB, 1)
    col = jax.lax.broadcasted_iota(jnp.int32, (tb, OUT_CLASSES), 1)
    logits = jnp.where(col == 0, l0, l1) + lb_ref[...]  # (TB, 2)

    # softmax(dim=1), numerically stable (exact reciprocal keeps 1e-5 tolerance).
    mx = jnp.max(logits, axis=1, keepdims=True)
    e = jnp.exp(logits - mx)
    out_ref[...] = e / jnp.sum(e, axis=1, keepdims=True)


def cnn_forward_pallas(x, conv_w, conv_b, l1_w, l1_b, *, block_b=8):
    """x: (B, 1, 1500) float32 (NCW). Returns (B, 2) softmax probabilities."""
    B = x.shape[0]
    tb = min(block_b, B)
    assert B % tb == 0 and (tb % 8 == 0 or tb == B), (B, tb)

    # --- host glue: zero-pad + unfold into tap-major (12, B, 150) -------------
    # win[j, b, p] = x_zeropad[b, 10*p + j]; lane axis = pool-window index p.
    # NOTE: the 2-element conv halo is still duplicated host-side (+20% HBM read
    # for this operand); acceptable tradeoff to keep the in-kernel compute to
    # plain lane-dense elementwise ops (no unaligned lane shifts in-kernel).
    x_pad = jnp.pad(x[:, 0, :], ((0, 0), (1, 1)))                     # (B, 1502)
    idx = jnp.arange(WIN_ROWS)[:, None] + POOL * jnp.arange(L_OUT)[None, :]
    win = jnp.transpose(x_pad[:, idx], (1, 0, 2))                     # (12, B, 150)

    # --- host glue: parameter repacking ---------------------------------------
    cw2 = conv_w.reshape(OUT_CH, KSIZE)                               # (5, 3)
    w0 = l1_w[0].reshape(OUT_CH, L_OUT)                               # (5, 150)
    w1 = l1_w[1].reshape(OUT_CH, L_OUT)                               # (5, 150)
    lb2 = l1_b.reshape(1, OUT_CLASSES)                                # (1, 2)

    grid = (B // tb,)
    return pl.pallas_call(
        cnn_kernel,
        out_shape=jax.ShapeDtypeStruct((B, OUT_CLASSES), jnp.float32),
        grid=grid,
        in_specs=[
            pl.BlockSpec((WIN_ROWS, tb, L_OUT), lambda b: (0, b, 0)),   # windows
            pl.BlockSpec((OUT_CH, KSIZE), lambda b: (0, 0),
                         memory_space=pltpu.MemorySpace.SMEM),          # conv w
            pl.BlockSpec((OUT_CH,), lambda b: (0,),
                         memory_space=pltpu.MemorySpace.SMEM),          # conv b
            pl.BlockSpec((OUT_CH, L_OUT), lambda b: (0, 0)),            # L1 w cls0
            pl.BlockSpec((OUT_CH, L_OUT), lambda b: (0, 0)),            # L1 w cls1
            pl.BlockSpec((1, OUT_CLASSES), lambda b: (0, 0)),           # L1 bias
        ],
        out_specs=pl.BlockSpec((tb, OUT_CLASSES), lambda b: (b, 0)),
        compiler_params=pltpu.CompilerParams(
            dimension_semantics=("parallel",)),
    )(win, cw2, conv_b, w0, w1, lb2)


def cnn_forward_ref(x, conv_w, conv_b, l1_w, l1_b):
    """Pure-JAX reference matching the PyTorch forward."""
    B = x.shape[0]
    y1 = jax.lax.conv_general_dilated(
        x, conv_w, window_strides=(1,), padding=((1, 1),),
        dimension_numbers=("NCH", "OIH", "NCH")) + conv_b[None, :, None]
    y3 = jnp.max(y1.reshape(B, OUT_CH, L_OUT, POOL), axis=-1)
    y3 = jnp.maximum(y3, 0.0)
    y4 = y3.reshape(B, H) @ l1_w.T + l1_b
    return jax.nn.softmax(y4, axis=1)


if __name__ == "__main__":
    key = jax.random.PRNGKey(0)
    k_x, k_cw, k_cb, k_lw, k_lb = jax.random.split(key, 5)

    B = 16  # small batch; grid = (2,) with TB=8 exercises the pipelined batch grid
    x = jax.random.normal(k_x, (B, IN_CHANN, L_IN), dtype=jnp.float32)

    # Deterministic synthetic parameters (shapes match the PyTorch module).
    conv_w = 0.3 * jax.random.normal(k_cw, (OUT_CH, IN_CHANN, KSIZE), dtype=jnp.float32)
    conv_b = 0.1 * jax.random.normal(k_cb, (OUT_CH,), dtype=jnp.float32)
    l1_w = 0.05 * jax.random.normal(k_lw, (OUT_CLASSES, H), dtype=jnp.float32)
    l1_b = 0.1 * jax.random.normal(k_lb, (OUT_CLASSES,), dtype=jnp.float32)

    out = cnn_forward_pallas(x, conv_w, conv_b, l1_w, l1_b)
    out = jax.block_until_ready(out)

    ref = cnn_forward_ref(x, conv_w, conv_b, l1_w, l1_b)
    assert out.shape == (B, OUT_CLASSES)
    assert jnp.allclose(out, ref, atol=1e-5, rtol=1e-5), (out, ref)

    print("KERNEL_OK")
</pallas_src>

<mosaic_0001>
module attributes {stable_mosaic.version = 11 : i64} {
  func.func @cnn_kernel(%arg0: i32, %arg1: memref<12x8x150xf32, #tpu.memory_space<vmem>>, %arg2: memref<5x3xf32, #tpu.memory_space<smem>>, %arg3: memref<5xf32, #tpu.memory_space<smem>>, %arg4: memref<5x150xf32, #tpu.memory_space<vmem>>, %arg5: memref<5x150xf32, #tpu.memory_space<vmem>>, %arg6: memref<1x2xf32, #tpu.memory_space<vmem>>, %arg7: memref<8x2xf32, #tpu.memory_space<vmem>>) attributes {dimension_semantics = [#tpu.dimension_semantics<parallel>], iteration_bounds = array<i64: 2>, scalar_prefetch = 0 : i64, scratch_operands = 0 : i64, tpu.core_type = #tpu.core_type<tc>, window_params = [{transform_indices = @transform_0, window_bounds = array<i64: 12, 8, 150>}, {transform_indices = @transform_1, window_bounds = array<i64: 5, 3>}, {transform_indices = @transform_2, window_bounds = array<i64: 5>}, {pipeline_mode = #tpu.pipeline_mode<synchronous>, transform_indices = @transform_3, window_bounds = array<i64: 5, 150>}, {pipeline_mode = #tpu.pipeline_mode<synchronous>, transform_indices = @transform_4, window_bounds = array<i64: 5, 150>}, {pipeline_mode = #tpu.pipeline_mode<synchronous>, transform_indices = @transform_5, window_bounds = array<i64: 1, 2>}, {transform_indices = @transform_6, window_bounds = array<i64: 8, 2>}]} {
    %c0 = arith.constant 0 : index
    %c0_0 = arith.constant 0 : index
    %c0_1 = arith.constant 0 : index
    %0 = vector.load %arg1[%c0, %c0_0, %c0_1] : memref<12x8x150xf32, #tpu.memory_space<vmem>>, vector<1x8x150xf32>
    %1 = vector.shape_cast %0 : vector<1x8x150xf32> to vector<8x150xf32>
    %c1 = arith.constant 1 : index
    %c0_2 = arith.constant 0 : index
    %c0_3 = arith.constant 0 : index
    %2 = vector.load %arg1[%c1, %c0_2, %c0_3] : memref<12x8x150xf32, #tpu.memory_space<vmem>>, vector<1x8x150xf32>
    %3 = vector.shape_cast %2 : vector<1x8x150xf32> to vector<8x150xf32>
    %c2 = arith.constant 2 : index
    %c0_4 = arith.constant 0 : index
    %c0_5 = arith.constant 0 : index
    %4 = vector.load %arg1[%c2, %c0_4, %c0_5] : memref<12x8x150xf32, #tpu.memory_space<vmem>>, vector<1x8x150xf32>
    %5 = vector.shape_cast %4 : vector<1x8x150xf32> to vector<8x150xf32>
    %c3 = arith.constant 3 : index
    %c0_6 = arith.constant 0 : index
    %c0_7 = arith.constant 0 : index
    %6 = vector.load %arg1[%c3, %c0_6, %c0_7] : memref<12x8x150xf32, #tpu.memory_space<vmem>>, vector<1x8x150xf32>
    %7 = vector.shape_cast %6 : vector<1x8x150xf32> to vector<8x150xf32>
    %c4 = arith.constant 4 : index
    %c0_8 = arith.constant 0 : index
    %c0_9 = arith.constant 0 : index
    %8 = vector.load %arg1[%c4, %c0_8, %c0_9] : memref<12x8x150xf32, #tpu.memory_space<vmem>>, vector<1x8x150xf32>
    %9 = vector.shape_cast %8 : vector<1x8x150xf32> to vector<8x150xf32>
    %c5 = arith.constant 5 : index
    %c0_10 = arith.constant 0 : index
    %c0_11 = arith.constant 0 : index
    %10 = vector.load %arg1[%c5, %c0_10, %c0_11] : memref<12x8x150xf32, #tpu.memory_space<vmem>>, vector<1x8x150xf32>
    %11 = vector.shape_cast %10 : vector<1x8x150xf32> to vector<8x150xf32>
    %c6 = arith.constant 6 : index
    %c0_12 = arith.constant 0 : index
    %c0_13 = arith.constant 0 : index
    %12 = vector.load %arg1[%c6, %c0_12, %c0_13] : memref<12x8x150xf32, #tpu.memory_space<vmem>>, vector<1x8x150xf32>
    %13 = vector.shape_cast %12 : vector<1x8x150xf32> to vector<8x150xf32>
    %c7 = arith.constant 7 : index
    %c0_14 = arith.constant 0 : index
    %c0_15 = arith.constant 0 : index
    %14 = vector.load %arg1[%c7, %c0_14, %c0_15] : memref<12x8x150xf32, #tpu.memory_space<vmem>>, vector<1x8x150xf32>
    %15 = vector.shape_cast %14 : vector<1x8x150xf32> to vector<8x150xf32>
    %c8 = arith.constant 8 : index
    %c0_16 = arith.constant 0 : index
    %c0_17 = arith.constant 0 : index
    %16 = vector.load %arg1[%c8, %c0_16, %c0_17] : memref<12x8x150xf32, #tpu.memory_space<vmem>>, vector<1x8x150xf32>
    %17 = vector.shape_cast %16 : vector<1x8x150xf32> to vector<8x150xf32>
    %c9 = arith.constant 9 : index
    %c0_18 = arith.constant 0 : index
    %c0_19 = arith.constant 0 : index
    %18 = vector.load %arg1[%c9, %c0_18, %c0_19] : memref<12x8x150xf32, #tpu.memory_space<vmem>>, vector<1x8x150xf32>
    %19 = vector.shape_cast %18 : vector<1x8x150xf32> to vector<8x150xf32>
    %c10 = arith.constant 10 : index
    %c0_20 = arith.constant 0 : index
    %c0_21 = arith.constant 0 : index
    %20 = vector.load %arg1[%c10, %c0_20, %c0_21] : memref<12x8x150xf32, #tpu.memory_space<vmem>>, vector<1x8x150xf32>
    %21 = vector.shape_cast %20 : vector<1x8x150xf32> to vector<8x150xf32>
    %c11 = arith.constant 11 : index
    %c0_22 = arith.constant 0 : index
    %c0_23 = arith.constant 0 : index
    %22 = vector.load %arg1[%c11, %c0_22, %c0_23] : memref<12x8x150xf32, #tpu.memory_space<vmem>>, vector<1x8x150xf32>
    %23 = vector.shape_cast %22 : vector<1x8x150xf32> to vector<8x150xf32>
    %c0_24 = arith.constant 0 : index
    %c0_25 = arith.constant 0 : index
    %24 = vector.load %arg4[%c0_24, %c0_25] : memref<5x150xf32, #tpu.memory_space<vmem>>, vector<5x150xf32>
    %c0_26 = arith.constant 0 : index
    %c0_27 = arith.constant 0 : index
    %25 = vector.load %arg5[%c0_26, %c0_27] : memref<5x150xf32, #tpu.memory_space<vmem>>, vector<5x150xf32>
    %cst = arith.constant 0.000000e+00 : f32
    %26 = vector.broadcast %cst : f32 to vector<8x150xf32>
    %cst_28 = arith.constant 0.000000e+00 : f32
    %27 = vector.broadcast %cst_28 : f32 to vector<8x150xf32>
    %c0_29 = arith.constant 0 : index
    %c0_30 = arith.constant 0 : index
    %28 = memref.load %arg2[%c0_29, %c0_30] : memref<5x3xf32, #tpu.memory_space<smem>>
    %c0_31 = arith.constant 0 : index
    %c1_32 = arith.constant 1 : index
    %29 = memref.load %arg2[%c0_31, %c1_32] : memref<5x3xf32, #tpu.memory_space<smem>>
    %c0_33 = arith.constant 0 : index
    %c2_34 = arith.constant 2 : index
    %30 = memref.load %arg2[%c0_33, %c2_34] : memref<5x3xf32, #tpu.memory_space<smem>>
    %31 = vector.broadcast %28 : f32 to vector<8x150xf32>
    %32 = arith.mulf %31, %1 : vector<8x150xf32>
    %33 = vector.broadcast %29 : f32 to vector<8x150xf32>
    %34 = arith.mulf %33, %3 : vector<8x150xf32>
    %35 = arith.addf %32, %34 : vector<8x150xf32>
    %36 = vector.broadcast %30 : f32 to vector<8x150xf32>
    %37 = arith.mulf %36, %5 : vector<8x150xf32>
    %38 = arith.addf %35, %37 : vector<8x150xf32>
    %39 = vector.broadcast %28 : f32 to vector<8x150xf32>
    %40 = arith.mulf %39, %3 : vector<8x150xf32>
    %41 = vector.broadcast %29 : f32 to vector<8x150xf32>
    %42 = arith.mulf %41, %5 : vector<8x150xf32>
    %43 = arith.addf %40, %42 : vector<8x150xf32>
    %44 = vector.broadcast %30 : f32 to vector<8x150xf32>
    %45 = arith.mulf %44, %7 : vector<8x150xf32>
    %46 = arith.addf %43, %45 : vector<8x150xf32>
    %47 = arith.maximumf %38, %46 : vector<8x150xf32>
    %48 = vector.broadcast %28 : f32 to vector<8x150xf32>
    %49 = arith.mulf %48, %5 : vector<8x150xf32>
    %50 = vector.broadcast %29 : f32 to vector<8x150xf32>
    %51 = arith.mulf %50, %7 : vector<8x150xf32>
    %52 = arith.addf %49, %51 : vector<8x150xf32>
    %53 = vector.broadcast %30 : f32 to vector<8x150xf32>
    %54 = arith.mulf %53, %9 : vector<8x150xf32>
    %55 = arith.addf %52, %54 : vector<8x150xf32>
    %56 = arith.maximumf %47, %55 : vector<8x150xf32>
    %57 = vector.broadcast %28 : f32 to vector<8x150xf32>
    %58 = arith.mulf %57, %7 : vector<8x150xf32>
    %59 = vector.broadcast %29 : f32 to vector<8x150xf32>
    %60 = arith.mulf %59, %9 : vector<8x150xf32>
    %61 = arith.addf %58, %60 : vector<8x150xf32>
    %62 = vector.broadcast %30 : f32 to vector<8x150xf32>
    %63 = arith.mulf %62, %11 : vector<8x150xf32>
    %64 = arith.addf %61, %63 : vector<8x150xf32>
    %65 = arith.maximumf %56, %64 : vector<8x150xf32>
    %66 = vector.broadcast %28 : f32 to vector<8x150xf32>
    %67 = arith.mulf %66, %9 : vector<8x150xf32>
    %68 = vector.broadcast %29 : f32 to vector<8x150xf32>
    %69 = arith.mulf %68, %11 : vector<8x150xf32>
    %70 = arith.addf %67, %69 : vector<8x150xf32>
    %71 = vector.broadcast %30 : f32 to vector<8x150xf32>
    %72 = arith.mulf %71, %13 : vector<8x150xf32>
    %73 = arith.addf %70, %72 : vector<8x150xf32>
    %74 = arith.maximumf %65, %73 : vector<8x150xf32>
    %75 = vector.broadcast %28 : f32 to vector<8x150xf32>
    %76 = arith.mulf %75, %11 : vector<8x150xf32>
    %77 = vector.broadcast %29 : f32 to vector<8x150xf32>
    %78 = arith.mulf %77, %13 : vector<8x150xf32>
    %79 = arith.addf %76, %78 : vector<8x150xf32>
    %80 = vector.broadcast %30 : f32 to vector<8x150xf32>
    %81 = arith.mulf %80, %15 : vector<8x150xf32>
    %82 = arith.addf %79, %81 : vector<8x150xf32>
    %83 = arith.maximumf %74, %82 : vector<8x150xf32>
    %84 = vector.broadcast %28 : f32 to vector<8x150xf32>
    %85 = arith.mulf %84, %13 : vector<8x150xf32>
    %86 = vector.broadcast %29 : f32 to vector<8x150xf32>
    %87 = arith.mulf %86, %15 : vector<8x150xf32>
    %88 = arith.addf %85, %87 : vector<8x150xf32>
    %89 = vector.broadcast %30 : f32 to vector<8x150xf32>
    %90 = arith.mulf %89, %17 : vector<8x150xf32>
    %91 = arith.addf %88, %90 : vector<8x150xf32>
    %92 = arith.maximumf %83, %91 : vector<8x150xf32>
    %93 = vector.broadcast %28 : f32 to vector<8x150xf32>
    %94 = arith.mulf %93, %15 : vector<8x150xf32>
    %95 = vector.broadcast %29 : f32 to vector<8x150xf32>
    %96 = arith.mulf %95, %17 : vector<8x150xf32>
    %97 = arith.addf %94, %96 : vector<8x150xf32>
    %98 = vector.broadcast %30 : f32 to vector<8x150xf32>
    %99 = arith.mulf %98, %19 : vector<8x150xf32>
    %100 = arith.addf %97, %99 : vector<8x150xf32>
    %101 = arith.maximumf %92, %100 : vector<8x150xf32>
    %102 = vector.broadcast %28 : f32 to vector<8x150xf32>
    %103 = arith.mulf %102, %17 : vector<8x150xf32>
    %104 = vector.broadcast %29 : f32 to vector<8x150xf32>
    %105 = arith.mulf %104, %19 : vector<8x150xf32>
    %106 = arith.addf %103, %105 : vector<8x150xf32>
    %107 = vector.broadcast %30 : f32 to vector<8x150xf32>
    %108 = arith.mulf %107, %21 : vector<8x150xf32>
    %109 = arith.addf %106, %108 : vector<8x150xf32>
    %110 = arith.maximumf %101, %109 : vector<8x150xf32>
    %111 = vector.broadcast %28 : f32 to vector<8x150xf32>
    %112 = arith.mulf %111, %19 : vector<8x150xf32>
    %113 = vector.broadcast %29 : f32 to vector<8x150xf32>
    %114 = arith.mulf %113, %21 : vector<8x150xf32>
    %115 = arith.addf %112, %114 : vector<8x150xf32>
    %116 = vector.broadcast %30 : f32 to vector<8x150xf32>
    %117 = arith.mulf %116, %23 : vector<8x150xf32>
    %118 = arith.addf %115, %117 : vector<8x150xf32>
    %119 = arith.maximumf %110, %118 : vector<8x150xf32>
    %c0_35 = arith.constant 0 : index
    %120 = memref.load %arg3[%c0_35] : memref<5xf32, #tpu.memory_space<smem>>
    %121 = vector.broadcast %120 : f32 to vector<8x150xf32>
    %122 = arith.addf %119, %121 : vector<8x150xf32>
    %cst_36 = arith.constant 0.000000e+00 : f32
    %123 = vector.broadcast %cst_36 : f32 to vector<8x150xf32>
    %124 = arith.maximumf %122, %123 : vector<8x150xf32>
    %125 = vector.extract_strided_slice %24 {offsets = [0, 0], sizes = [1, 150], strides = [1, 1]} : vector<5x150xf32> to vector<1x150xf32>
    %126 = vector.shape_cast %125 : vector<1x150xf32> to vector<150xf32>
    %127 = vector.shape_cast %126 : vector<150xf32> to vector<1x150xf32>
    %128 = vector.broadcast %127 : vector<1x150xf32> to vector<8x150xf32>
    %129 = arith.mulf %124, %128 : vector<8x150xf32>
    %130 = arith.addf %26, %129 : vector<8x150xf32>
    %131 = vector.extract_strided_slice %25 {offsets = [0, 0], sizes = [1, 150], strides = [1, 1]} : vector<5x150xf32> to vector<1x150xf32>
    %132 = vector.shape_cast %131 : vector<1x150xf32> to vector<150xf32>
    %133 = vector.shape_cast %132 : vector<150xf32> to vector<1x150xf32>
    %134 = vector.broadcast %133 : vector<1x150xf32> to vector<8x150xf32>
    %135 = arith.mulf %124, %134 : vector<8x150xf32>
    %136 = arith.addf %27, %135 : vector<8x150xf32>
    %c1_37 = arith.constant 1 : index
    %c0_38 = arith.constant 0 : index
    %137 = memref.load %arg2[%c1_37, %c0_38] : memref<5x3xf32, #tpu.memory_space<smem>>
    %c1_39 = arith.constant 1 : index
    %c1_40 = arith.constant 1 : index
    %138 = memref.load %arg2[%c1_39, %c1_40] : memref<5x3xf32, #tpu.memory_space<smem>>
    %c1_41 = arith.constant 1 : index
    %c2_42 = arith.constant 2 : index
    %139 = memref.load %arg2[%c1_41, %c2_42] : memref<5x3xf32, #tpu.memory_space<smem>>
    %140 = vector.broadcast %137 : f32 to vector<8x150xf32>
    %141 = arith.mulf %140, %1 : vector<8x150xf32>
    %142 = vector.broadcast %138 : f32 to vector<8x150xf32>
    %143 = arith.mulf %142, %3 : vector<8x150xf32>
    %144 = arith.addf %141, %143 : vector<8x150xf32>
    %145 = vector.broadcast %139 : f32 to vector<8x150xf32>
    %146 = arith.mulf %145, %5 : vector<8x150xf32>
    %147 = arith.addf %144, %146 : vector<8x150xf32>
    %148 = vector.broadcast %137 : f32 to vector<8x150xf32>
    %149 = arith.mulf %148, %3 : vector<8x150xf32>
    %150 = vector.broadcast %138 : f32 to vector<8x150xf32>
    %151 = arith.mulf %150, %5 : vector<8x150xf32>
    %152 = arith.addf %149, %151 : vector<8x150xf32>
    %153 = vector.broadcast %139 : f32 to vector<8x150xf32>
    %154 = arith.mulf %153, %7 : vector<8x150xf32>
    %155 = arith.addf %152, %154 : vector<8x150xf32>
    %156 = arith.maximumf %147, %155 : vector<8x150xf32>
    %157 = vector.broadcast %137 : f32 to vector<8x150xf32>
    %158 = arith.mulf %157, %5 : vector<8x150xf32>
    %159 = vector.broadcast %138 : f32 to vector<8x150xf32>
    %160 = arith.mulf %159, %7 : vector<8x150xf32>
    %161 = arith.addf %158, %160 : vector<8x150xf32>
    %162 = vector.broadcast %139 : f32 to vector<8x150xf32>
    %163 = arith.mulf %162, %9 : vector<8x150xf32>
    %164 = arith.addf %161, %163 : vector<8x150xf32>
    %165 = arith.maximumf %156, %164 : vector<8x150xf32>
    %166 = vector.broadcast %137 : f32 to vector<8x150xf32>
    %167 = arith.mulf %166, %7 : vector<8x150xf32>
    %168 = vector.broadcast %138 : f32 to vector<8x150xf32>
    %169 = arith.mulf %168, %9 : vector<8x150xf32>
    %170 = arith.addf %167, %169 : vector<8x150xf32>
    %171 = vector.broadcast %139 : f32 to vector<8x150xf32>
    %172 = arith.mulf %171, %11 : vector<8x150xf32>
    %173 = arith.addf %170, %172 : vector<8x150xf32>
    %174 = arith.maximumf %165, %173 : vector<8x150xf32>
    %175 = vector.broadcast %137 : f32 to vector<8x150xf32>
    %176 = arith.mulf %175, %9 : vector<8x150xf32>
    %177 = vector.broadcast %138 : f32 to vector<8x150xf32>
    %178 = arith.mulf %177, %11 : vector<8x150xf32>
    %179 = arith.addf %176, %178 : vector<8x150xf32>
    %180 = vector.broadcast %139 : f32 to vector<8x150xf32>
    %181 = arith.mulf %180, %13 : vector<8x150xf32>
    %182 = arith.addf %179, %181 : vector<8x150xf32>
    %183 = arith.maximumf %174, %182 : vector<8x150xf32>
    %184 = vector.broadcast %137 : f32 to vector<8x150xf32>
    %185 = arith.mulf %184, %11 : vector<8x150xf32>
    %186 = vector.broadcast %138 : f32 to vector<8x150xf32>
    %187 = arith.mulf %186, %13 : vector<8x150xf32>
    %188 = arith.addf %185, %187 : vector<8x150xf32>
    %189 = vector.broadcast %139 : f32 to vector<8x150xf32>
    %190 = arith.mulf %189, %15 : vector<8x150xf32>
    %191 = arith.addf %188, %190 : vector<8x150xf32>
    %192 = arith.maximumf %183, %191 : vector<8x150xf32>
    %193 = vector.broadcast %137 : f32 to vector<8x150xf32>
    %194 = arith.mulf %193, %13 : vector<8x150xf32>
    %195 = vector.broadcast %138 : f32 to vector<8x150xf32>
    %196 = arith.mulf %195, %15 : vector<8x150xf32>
    %197 = arith.addf %194, %196 : vector<8x150xf32>
    %198 = vector.broadcast %139 : f32 to vector<8x150xf32>
    %199 = arith.mulf %198, %17 : vector<8x150xf32>
    %200 = arith.addf %197, %199 : vector<8x150xf32>
    %201 = arith.maximumf %192, %200 : vector<8x150xf32>
    %202 = vector.broadcast %137 : f32 to vector<8x150xf32>
    %203 = arith.mulf %202, %15 : vector<8x150xf32>
    %204 = vector.broadcast %138 : f32 to vector<8x150xf32>
    %205 = arith.mulf %204, %17 : vector<8x150xf32>
    %206 = arith.addf %203, %205 : vector<8x150xf32>
    %207 = vector.broadcast %139 : f32 to vector<8x150xf32>
    %208 = arith.mulf %207, %19 : vector<8x150xf32>
    %209 = arith.addf %206, %208 : vector<8x150xf32>
    %210 = arith.maximumf %201, %209 : vector<8x150xf32>
    %211 = vector.broadcast %137 : f32 to vector<8x150xf32>
    %212 = arith.mulf %211, %17 : vector<8x150xf32>
    %213 = vector.broadcast %138 : f32 to vector<8x150xf32>
    %214 = arith.mulf %213, %19 : vector<8x150xf32>
    %215 = arith.addf %212, %214 : vector<8x150xf32>
    %216 = vector.broadcast %139 : f32 to vector<8x150xf32>
    %217 = arith.mulf %216, %21 : vector<8x150xf32>
    %218 = arith.addf %215, %217 : vector<8x150xf32>
    %219 = arith.maximumf %210, %218 : vector<8x150xf32>
    %220 = vector.broadcast %137 : f32 to vector<8x150xf32>
    %221 = arith.mulf %220, %19 : vector<8x150xf32>
    %222 = vector.broadcast %138 : f32 to vector<8x150xf32>
    %223 = arith.mulf %222, %21 : vector<8x150xf32>
    %224 = arith.addf %221, %223 : vector<8x150xf32>
    %225 = vector.broadcast %139 : f32 to vector<8x150xf32>
    %226 = arith.mulf %225, %23 : vector<8x150xf32>
    %227 = arith.addf %224, %226 : vector<8x150xf32>
    %228 = arith.maximumf %219, %227 : vector<8x150xf32>
    %c1_43 = arith.constant 1 : index
    %229 = memref.load %arg3[%c1_43] : memref<5xf32, #tpu.memory_space<smem>>
    %230 = vector.broadcast %229 : f32 to vector<8x150xf32>
    %231 = arith.addf %228, %230 : vector<8x150xf32>
    %cst_44 = arith.constant 0.000000e+00 : f32
    %232 = vector.broadcast %cst_44 : f32 to vector<8x150xf32>
    %233 = arith.maximumf %231, %232 : vector<8x150xf32>
    %234 = vector.extract_strided_slice %24 {offsets = [1, 0], sizes = [1, 150], strides = [1, 1]} : vector<5x150xf32> to vector<1x150xf32>
    %235 = vector.shape_cast %234 : vector<1x150xf32> to vector<150xf32>
    %236 = vector.shape_cast %235 : vector<150xf32> to vector<1x150xf32>
    %237 = vector.broadcast %236 : vector<1x150xf32> to vector<8x150xf32>
    %238 = arith.mulf %233, %237 : vector<8x150xf32>
    %239 = arith.addf %130, %238 : vector<8x150xf32>
    %240 = vector.extract_strided_slice %25 {offsets = [1, 0], sizes = [1, 150], strides = [1, 1]} : vector<5x150xf32> to vector<1x150xf32>
    %241 = vector.shape_cast %240 : vector<1x150xf32> to vector<150xf32>
    %242 = vector.shape_cast %241 : vector<150xf32> to vector<1x150xf32>
    %243 = vector.broadcast %242 : vector<1x150xf32> to vector<8x150xf32>
    %244 = arith.mulf %233, %243 : vector<8x150xf32>
    %245 = arith.addf %136, %244 : vector<8x150xf32>
    %c2_45 = arith.constant 2 : index
    %c0_46 = arith.constant 0 : index
    %246 = memref.load %arg2[%c2_45, %c0_46] : memref<5x3xf32, #tpu.memory_space<smem>>
    %c2_47 = arith.constant 2 : index
    %c1_48 = arith.constant 1 : index
    %247 = memref.load %arg2[%c2_47, %c1_48] : memref<5x3xf32, #tpu.memory_space<smem>>
    %c2_49 = arith.constant 2 : index
    %c2_50 = arith.constant 2 : index
    %248 = memref.load %arg2[%c2_49, %c2_50] : memref<5x3xf32, #tpu.memory_space<smem>>
    %249 = vector.broadcast %246 : f32 to vector<8x150xf32>
    %250 = arith.mulf %249, %1 : vector<8x150xf32>
    %251 = vector.broadcast %247 : f32 to vector<8x150xf32>
    %252 = arith.mulf %251, %3 : vector<8x150xf32>
    %253 = arith.addf %250, %252 : vector<8x150xf32>
    %254 = vector.broadcast %248 : f32 to vector<8x150xf32>
    %255 = arith.mulf %254, %5 : vector<8x150xf32>
    %256 = arith.addf %253, %255 : vector<8x150xf32>
    %257 = vector.broadcast %246 : f32 to vector<8x150xf32>
    %258 = arith.mulf %257, %3 : vector<8x150xf32>
    %259 = vector.broadcast %247 : f32 to vector<8x150xf32>
    %260 = arith.mulf %259, %5 : vector<8x150xf32>
    %261 = arith.addf %258, %260 : vector<8x150xf32>
    %262 = vector.broadcast %248 : f32 to vector<8x150xf32>
    %263 = arith.mulf %262, %7 : vector<8x150xf32>
    %264 = arith.addf %261, %263 : vector<8x150xf32>
    %265 = arith.maximumf %256, %264 : vector<8x150xf32>
    %266 = vector.broadcast %246 : f32 to vector<8x150xf32>
    %267 = arith.mulf %266, %5 : vector<8x150xf32>
    %268 = vector.broadcast %247 : f32 to vector<8x150xf32>
    %269 = arith.mulf %268, %7 : vector<8x150xf32>
    %270 = arith.addf %267, %269 : vector<8x150xf32>
    %271 = vector.broadcast %248 : f32 to vector<8x150xf32>
    %272 = arith.mulf %271, %9 : vector<8x150xf32>
    %273 = arith.addf %270, %272 : vector<8x150xf32>
    %274 = arith.maximumf %265, %273 : vector<8x150xf32>
    %275 = vector.broadcast %246 : f32 to vector<8x150xf32>
    %276 = arith.mulf %275, %7 : vector<8x150xf32>
    %277 = vector.broadcast %247 : f32 to vector<8x150xf32>
    %278 = arith.mulf %277, %9 : vector<8x150xf32>
    %279 = arith.addf %276, %278 : vector<8x150xf32>
    %280 = vector.broadcast %248 : f32 to vector<8x150xf32>
    %281 = arith.mulf %280, %11 : vector<8x150xf32>
    %282 = arith.addf %279, %281 : vector<8x150xf32>
    %283 = arith.maximumf %274, %282 : vector<8x150xf32>
    %284 = vector.broadcast %246 : f32 to vector<8x150xf32>
    %285 = arith.mulf %284, %9 : vector<8x150xf32>
    %286 = vector.broadcast %247 : f32 to vector<8x150xf32>
    %287 = arith.mulf %286, %11 : vector<8x150xf32>
    %288 = arith.addf %285, %287 : vector<8x150xf32>
    %289 = vector.broadcast %248 : f32 to vector<8x150xf32>
    %290 = arith.mulf %289, %13 : vector<8x150xf32>
    %291 = arith.addf %288, %290 : vector<8x150xf32>
    %292 = arith.maximumf %283, %291 : vector<8x150xf32>
    %293 = vector.broadcast %246 : f32 to vector<8x150xf32>
    %294 = arith.mulf %293, %11 : vector<8x150xf32>
    %295 = vector.broadcast %247 : f32 to vector<8x150xf32>
    %296 = arith.mulf %295, %13 : vector<8x150xf32>
    %297 = arith.addf %294, %296 : vector<8x150xf32>
    %298 = vector.broadcast %248 : f32 to vector<8x150xf32>
    %299 = arith.mulf %298, %15 : vector<8x150xf32>
    %300 = arith.addf %297, %299 : vector<8x150xf32>
    %301 = arith.maximumf %292, %300 : vector<8x150xf32>
    %302 = vector.broadcast %246 : f32 to vector<8x150xf32>
    %303 = arith.mulf %302, %13 : vector<8x150xf32>
    %304 = vector.broadcast %247 : f32 to vector<8x150xf32>
    %305 = arith.mulf %304, %15 : vector<8x150xf32>
    %306 = arith.addf %303, %305 : vector<8x150xf32>
    %307 = vector.broadcast %248 : f32 to vector<8x150xf32>
    %308 = arith.mulf %307, %17 : vector<8x150xf32>
    %309 = arith.addf %306, %308 : vector<8x150xf32>
    %310 = arith.maximumf %301, %309 : vector<8x150xf32>
    %311 = vector.broadcast %246 : f32 to vector<8x150xf32>
    %312 = arith.mulf %311, %15 : vector<8x150xf32>
    %313 = vector.broadcast %247 : f32 to vector<8x150xf32>
    %314 = arith.mulf %313, %17 : vector<8x150xf32>
    %315 = arith.addf %312, %314 : vector<8x150xf32>
    %316 = vector.broadcast %248 : f32 to vector<8x150xf32>
    %317 = arith.mulf %316, %19 : vector<8x150xf32>
    %318 = arith.addf %315, %317 : vector<8x150xf32>
    %319 = arith.maximumf %310, %318 : vector<8x150xf32>
    %320 = vector.broadcast %246 : f32 to vector<8x150xf32>
    %321 = arith.mulf %320, %17 : vector<8x150xf32>
    %322 = vector.broadcast %247 : f32 to vector<8x150xf32>
    %323 = arith.mulf %322, %19 : vector<8x150xf32>
    %324 = arith.addf %321, %323 : vector<8x150xf32>
    %325 = vector.broadcast %248 : f32 to vector<8x150xf32>
    %326 = arith.mulf %325, %21 : vector<8x150xf32>
    %327 = arith.addf %324, %326 : vector<8x150xf32>
    %328 = arith.maximumf %319, %327 : vector<8x150xf32>
    %329 = vector.broadcast %246 : f32 to vector<8x150xf32>
    %330 = arith.mulf %329, %19 : vector<8x150xf32>
    %331 = vector.broadcast %247 : f32 to vector<8x150xf32>
    %332 = arith.mulf %331, %21 : vector<8x150xf32>
    %333 = arith.addf %330, %332 : vector<8x150xf32>
    %334 = vector.broadcast %248 : f32 to vector<8x150xf32>
    %335 = arith.mulf %334, %23 : vector<8x150xf32>
    %336 = arith.addf %333, %335 : vector<8x150xf32>
    %337 = arith.maximumf %328, %336 : vector<8x150xf32>
    %c2_51 = arith.constant 2 : index
    %338 = memref.load %arg3[%c2_51] : memref<5xf32, #tpu.memory_space<smem>>
    %339 = vector.broadcast %338 : f32 to vector<8x150xf32>
    %340 = arith.addf %337, %339 : vector<8x150xf32>
    %cst_52 = arith.constant 0.000000e+00 : f32
    %341 = vector.broadcast %cst_52 : f32 to vector<8x150xf32>
    %342 = arith.maximumf %340, %341 : vector<8x150xf32>
    %343 = vector.extract_strided_slice %24 {offsets = [2, 0], sizes = [1, 150], strides = [1, 1]} : vector<5x150xf32> to vector<1x150xf32>
    %344 = vector.shape_cast %343 : vector<1x150xf32> to vector<150xf32>
    %345 = vector.shape_cast %344 : vector<150xf32> to vector<1x150xf32>
    %346 = vector.broadcast %345 : vector<1x150xf32> to vector<8x150xf32>
    %347 = arith.mulf %342, %346 : vector<8x150xf32>
    %348 = arith.addf %239, %347 : vector<8x150xf32>
    %349 = vector.extract_strided_slice %25 {offsets = [2, 0], sizes = [1, 150], strides = [1, 1]} : vector<5x150xf32> to vector<1x150xf32>
    %350 = vector.shape_cast %349 : vector<1x150xf32> to vector<150xf32>
    %351 = vector.shape_cast %350 : vector<150xf32> to vector<1x150xf32>
    %352 = vector.broadcast %351 : vector<1x150xf32> to vector<8x150xf32>
    %353 = arith.mulf %342, %352 : vector<8x150xf32>
    %354 = arith.addf %245, %353 : vector<8x150xf32>
    %c3_53 = arith.constant 3 : index
    %c0_54 = arith.constant 0 : index
    %355 = memref.load %arg2[%c3_53, %c0_54] : memref<5x3xf32, #tpu.memory_space<smem>>
    %c3_55 = arith.constant 3 : index
    %c1_56 = arith.constant 1 : index
    %356 = memref.load %arg2[%c3_55, %c1_56] : memref<5x3xf32, #tpu.memory_space<smem>>
    %c3_57 = arith.constant 3 : index
    %c2_58 = arith.constant 2 : index
    %357 = memref.load %arg2[%c3_57, %c2_58] : memref<5x3xf32, #tpu.memory_space<smem>>
    %358 = vector.broadcast %355 : f32 to vector<8x150xf32>
    %359 = arith.mulf %358, %1 : vector<8x150xf32>
    %360 = vector.broadcast %356 : f32 to vector<8x150xf32>
    %361 = arith.mulf %360, %3 : vector<8x150xf32>
    %362 = arith.addf %359, %361 : vector<8x150xf32>
    %363 = vector.broadcast %357 : f32 to vector<8x150xf32>
    %364 = arith.mulf %363, %5 : vector<8x150xf32>
    %365 = arith.addf %362, %364 : vector<8x150xf32>
    %366 = vector.broadcast %355 : f32 to vector<8x150xf32>
    %367 = arith.mulf %366, %3 : vector<8x150xf32>
    %368 = vector.broadcast %356 : f32 to vector<8x150xf32>
    %369 = arith.mulf %368, %5 : vector<8x150xf32>
    %370 = arith.addf %367, %369 : vector<8x150xf32>
    %371 = vector.broadcast %357 : f32 to vector<8x150xf32>
    %372 = arith.mulf %371, %7 : vector<8x150xf32>
    %373 = arith.addf %370, %372 : vector<8x150xf32>
    %374 = arith.maximumf %365, %373 : vector<8x150xf32>
    %375 = vector.broadcast %355 : f32 to vector<8x150xf32>
    %376 = arith.mulf %375, %5 : vector<8x150xf32>
    %377 = vector.broadcast %356 : f32 to vector<8x150xf32>
    %378 = arith.mulf %377, %7 : vector<8x150xf32>
    %379 = arith.addf %376, %378 : vector<8x150xf32>
    %380 = vector.broadcast %357 : f32 to vector<8x150xf32>
    %381 = arith.mulf %380, %9 : vector<8x150xf32>
    %382 = arith.addf %379, %381 : vector<8x150xf32>
    %383 = arith.maximumf %374, %382 : vector<8x150xf32>
    %384 = vector.broadcast %355 : f32 to vector<8x150xf32>
    %385 = arith.mulf %384, %7 : vector<8x150xf32>
    %386 = vector.broadcast %356 : f32 to vector<8x150xf32>
    %387 = arith.mulf %386, %9 : vector<8x150xf32>
    %388 = arith.addf %385, %387 : vector<8x150xf32>
    %389 = vector.broadcast %357 : f32 to vector<8x150xf32>
    %390 = arith.mulf %389, %11 : vector<8x150xf32>
    %391 = arith.addf %388, %390 : vector<8x150xf32>
    %392 = arith.maximumf %383, %391 : vector<8x150xf32>
    %393 = vector.broadcast %355 : f32 to vector<8x150xf32>
    %394 = arith.mulf %393, %9 : vector<8x150xf32>
    %395 = vector.broadcast %356 : f32 to vector<8x150xf32>
    %396 = arith.mulf %395, %11 : vector<8x150xf32>
    %397 = arith.addf %394, %396 : vector<8x150xf32>
    %398 = vector.broadcast %357 : f32 to vector<8x150xf32>
    %399 = arith.mulf %398, %13 : vector<8x150xf32>
    %400 = arith.addf %397, %399 : vector<8x150xf32>
    %401 = arith.maximumf %392, %400 : vector<8x150xf32>
    %402 = vector.broadcast %355 : f32 to vector<8x150xf32>
    %403 = arith.mulf %402, %11 : vector<8x150xf32>
    %404 = vector.broadcast %356 : f32 to vector<8x150xf32>
    %405 = arith.mulf %404, %13 : vector<8x150xf32>
    %406 = arith.addf %403, %405 : vector<8x150xf32>
    %407 = vector.broadcast %357 : f32 to vector<8x150xf32>
    %408 = arith.mulf %407, %15 : vector<8x150xf32>
    %409 = arith.addf %406, %408 : vector<8x150xf32>
    %410 = arith.maximumf %401, %409 : vector<8x150xf32>
    %411 = vector.broadcast %355 : f32 to vector<8x150xf32>
    %412 = arith.mulf %411, %13 : vector<8x150xf32>
    %413 = vector.broadcast %356 : f32 to vector<8x150xf32>
    %414 = arith.mulf %413, %15 : vector<8x150xf32>
    %415 = arith.addf %412, %414 : vector<8x150xf32>
    %416 = vector.broadcast %357 : f32 to vector<8x150xf32>
    %417 = arith.mulf %416, %17 : vector<8x150xf32>
    %418 = arith.addf %415, %417 : vector<8x150xf32>
    %419 = arith.maximumf %410, %418 : vector<8x150xf32>
    %420 = vector.broadcast %355 : f32 to vector<8x150xf32>
    %421 = arith.mulf %420, %15 : vector<8x150xf32>
    %422 = vector.broadcast %356 : f32 to vector<8x150xf32>
    %423 = arith.mulf %422, %17 : vector<8x150xf32>
    %424 = arith.addf %421, %423 : vector<8x150xf32>
    %425 = vector.broadcast %357 : f32 to vector<8x150xf32>
    %426 = arith.mulf %425, %19 : vector<8x150xf32>
    %427 = arith.addf %424, %426 : vector<8x150xf32>
    %428 = arith.maximumf %419, %427 : vector<8x150xf32>
    %429 = vector.broadcast %355 : f32 to vector<8x150xf32>
    %430 = arith.mulf %429, %17 : vector<8x150xf32>
    %431 = vector.broadcast %356 : f32 to vector<8x150xf32>
    %432 = arith.mulf %431, %19 : vector<8x150xf32>
    %433 = arith.addf %430, %432 : vector<8x150xf32>
    %434 = vector.broadcast %357 : f32 to vector<8x150xf32>
    %435 = arith.mulf %434, %21 : vector<8x150xf32>
    %436 = arith.addf %433, %435 : vector<8x150xf32>
    %437 = arith.maximumf %428, %436 : vector<8x150xf32>
    %438 = vector.broadcast %355 : f32 to vector<8x150xf32>
    %439 = arith.mulf %438, %19 : vector<8x150xf32>
    %440 = vector.broadcast %356 : f32 to vector<8x150xf32>
    %441 = arith.mulf %440, %21 : vector<8x150xf32>
    %442 = arith.addf %439, %441 : vector<8x150xf32>
    %443 = vector.broadcast %357 : f32 to vector<8x150xf32>
    %444 = arith.mulf %443, %23 : vector<8x150xf32>
    %445 = arith.addf %442, %444 : vector<8x150xf32>
    %446 = arith.maximumf %437, %445 : vector<8x150xf32>
    %c3_59 = arith.constant 3 : index
    %447 = memref.load %arg3[%c3_59] : memref<5xf32, #tpu.memory_space<smem>>
    %448 = vector.broadcast %447 : f32 to vector<8x150xf32>
    %449 = arith.addf %446, %448 : vector<8x150xf32>
    %cst_60 = arith.constant 0.000000e+00 : f32
    %450 = vector.broadcast %cst_60 : f32 to vector<8x150xf32>
    %451 = arith.maximumf %449, %450 : vector<8x150xf32>
    %452 = vector.extract_strided_slice %24 {offsets = [3, 0], sizes = [1, 150], strides = [1, 1]} : vector<5x150xf32> to vector<1x150xf32>
    %453 = vector.shape_cast %452 : vector<1x150xf32> to vector<150xf32>
    %454 = vector.shape_cast %453 : vector<150xf32> to vector<1x150xf32>
    %455 = vector.broadcast %454 : vector<1x150xf32> to vector<8x150xf32>
    %456 = arith.mulf %451, %455 : vector<8x150xf32>
    %457 = arith.addf %348, %456 : vector<8x150xf32>
    %458 = vector.extract_strided_slice %25 {offsets = [3, 0], sizes = [1, 150], strides = [1, 1]} : vector<5x150xf32> to vector<1x150xf32>
    %459 = vector.shape_cast %458 : vector<1x150xf32> to vector<150xf32>
    %460 = vector.shape_cast %459 : vector<150xf32> to vector<1x150xf32>
    %461 = vector.broadcast %460 : vector<1x150xf32> to vector<8x150xf32>
    %462 = arith.mulf %451, %461 : vector<8x150xf32>
    %463 = arith.addf %354, %462 : vector<8x150xf32>
    %c4_61 = arith.constant 4 : index
    %c0_62 = arith.constant 0 : index
    %464 = memref.load %arg2[%c4_61, %c0_62] : memref<5x3xf32, #tpu.memory_space<smem>>
    %c4_63 = arith.constant 4 : index
    %c1_64 = arith.constant 1 : index
    %465 = memref.load %arg2[%c4_63, %c1_64] : memref<5x3xf32, #tpu.memory_space<smem>>
    %c4_65 = arith.constant 4 : index
    %c2_66 = arith.constant 2 : index
    %466 = memref.load %arg2[%c4_65, %c2_66] : memref<5x3xf32, #tpu.memory_space<smem>>
    %467 = vector.broadcast %464 : f32 to vector<8x150xf32>
    %468 = arith.mulf %467, %1 : vector<8x150xf32>
    %469 = vector.broadcast %465 : f32 to vector<8x150xf32>
    %470 = arith.mulf %469, %3 : vector<8x150xf32>
    %471 = arith.addf %468, %470 : vector<8x150xf32>
    %472 = vector.broadcast %466 : f32 to vector<8x150xf32>
    %473 = arith.mulf %472, %5 : vector<8x150xf32>
    %474 = arith.addf %471, %473 : vector<8x150xf32>
    %475 = vector.broadcast %464 : f32 to vector<8x150xf32>
    %476 = arith.mulf %475, %3 : vector<8x150xf32>
    %477 = vector.broadcast %465 : f32 to vector<8x150xf32>
    %478 = arith.mulf %477, %5 : vector<8x150xf32>
    %479 = arith.addf %476, %478 : vector<8x150xf32>
    %480 = vector.broadcast %466 : f32 to vector<8x150xf32>
    %481 = arith.mulf %480, %7 : vector<8x150xf32>
    %482 = arith.addf %479, %481 : vector<8x150xf32>
    %483 = arith.maximumf %474, %482 : vector<8x150xf32>
    %484 = vector.broadcast %464 : f32 to vector<8x150xf32>
    %485 = arith.mulf %484, %5 : vector<8x150xf32>
    %486 = vector.broadcast %465 : f32 to vector<8x150xf32>
    %487 = arith.mulf %486, %7 : vector<8x150xf32>
    %488 = arith.addf %485, %487 : vector<8x150xf32>
    %489 = vector.broadcast %466 : f32 to vector<8x150xf32>
    %490 = arith.mulf %489, %9 : vector<8x150xf32>
    %491 = arith.addf %488, %490 : vector<8x150xf32>
    %492 = arith.maximumf %483, %491 : vector<8x150xf32>
    %493 = vector.broadcast %464 : f32 to vector<8x150xf32>
    %494 = arith.mulf %493, %7 : vector<8x150xf32>
    %495 = vector.broadcast %465 : f32 to vector<8x150xf32>
    %496 = arith.mulf %495, %9 : vector<8x150xf32>
    %497 = arith.addf %494, %496 : vector<8x150xf32>
    %498 = vector.broadcast %466 : f32 to vector<8x150xf32>
    %499 = arith.mulf %498, %11 : vector<8x150xf32>
    %500 = arith.addf %497, %499 : vector<8x150xf32>
    %501 = arith.maximumf %492, %500 : vector<8x150xf32>
    %502 = vector.broadcast %464 : f32 to vector<8x150xf32>
    %503 = arith.mulf %502, %9 : vector<8x150xf32>
    %504 = vector.broadcast %465 : f32 to vector<8x150xf32>
    %505 = arith.mulf %504, %11 : vector<8x150xf32>
    %506 = arith.addf %503, %505 : vector<8x150xf32>
    %507 = vector.broadcast %466 : f32 to vector<8x150xf32>
    %508 = arith.mulf %507, %13 : vector<8x150xf32>
    %509 = arith.addf %506, %508 : vector<8x150xf32>
    %510 = arith.maximumf %501, %509 : vector<8x150xf32>
    %511 = vector.broadcast %464 : f32 to vector<8x150xf32>
    %512 = arith.mulf %511, %11 : vector<8x150xf32>
    %513 = vector.broadcast %465 : f32 to vector<8x150xf32>
    %514 = arith.mulf %513, %13 : vector<8x150xf32>
    %515 = arith.addf %512, %514 : vector<8x150xf32>
    %516 = vector.broadcast %466 : f32 to vector<8x150xf32>
    %517 = arith.mulf %516, %15 : vector<8x150xf32>
    %518 = arith.addf %515, %517 : vector<8x150xf32>
    %519 = arith.maximumf %510, %518 : vector<8x150xf32>
    %520 = vector.broadcast %464 : f32 to vector<8x150xf32>
    %521 = arith.mulf %520, %13 : vector<8x150xf32>
    %522 = vector.broadcast %465 : f32 to vector<8x150xf32>
    %523 = arith.mulf %522, %15 : vector<8x150xf32>
    %524 = arith.addf %521, %523 : vector<8x150xf32>
    %525 = vector.broadcast %466 : f32 to vector<8x150xf32>
    %526 = arith.mulf %525, %17 : vector<8x150xf32>
    %527 = arith.addf %524, %526 : vector<8x150xf32>
    %528 = arith.maximumf %519, %527 : vector<8x150xf32>
    %529 = vector.broadcast %464 : f32 to vector<8x150xf32>
    %530 = arith.mulf %529, %15 : vector<8x150xf32>
    %531 = vector.broadcast %465 : f32 to vector<8x150xf32>
    %532 = arith.mulf %531, %17 : vector<8x150xf32>
    %533 = arith.addf %530, %532 : vector<8x150xf32>
    %534 = vector.broadcast %466 : f32 to vector<8x150xf32>
    %535 = arith.mulf %534, %19 : vector<8x150xf32>
    %536 = arith.addf %533, %535 : vector<8x150xf32>
    %537 = arith.maximumf %528, %536 : vector<8x150xf32>
    %538 = vector.broadcast %464 : f32 to vector<8x150xf32>
    %539 = arith.mulf %538, %17 : vector<8x150xf32>
    %540 = vector.broadcast %465 : f32 to vector<8x150xf32>
    %541 = arith.mulf %540, %19 : vector<8x150xf32>
    %542 = arith.addf %539, %541 : vector<8x150xf32>
    %543 = vector.broadcast %466 : f32 to vector<8x150xf32>
    %544 = arith.mulf %543, %21 : vector<8x150xf32>
    %545 = arith.addf %542, %544 : vector<8x150xf32>
    %546 = arith.maximumf %537, %545 : vector<8x150xf32>
    %547 = vector.broadcast %464 : f32 to vector<8x150xf32>
    %548 = arith.mulf %547, %19 : vector<8x150xf32>
    %549 = vector.broadcast %465 : f32 to vector<8x150xf32>
    %550 = arith.mulf %549, %21 : vector<8x150xf32>
    %551 = arith.addf %548, %550 : vector<8x150xf32>
    %552 = vector.broadcast %466 : f32 to vector<8x150xf32>
    %553 = arith.mulf %552, %23 : vector<8x150xf32>
    %554 = arith.addf %551, %553 : vector<8x150xf32>
    %555 = arith.maximumf %546, %554 : vector<8x150xf32>
    %c4_67 = arith.constant 4 : index
    %556 = memref.load %arg3[%c4_67] : memref<5xf32, #tpu.memory_space<smem>>
    %557 = vector.broadcast %556 : f32 to vector<8x150xf32>
    %558 = arith.addf %555, %557 : vector<8x150xf32>
    %cst_68 = arith.constant 0.000000e+00 : f32
    %559 = vector.broadcast %cst_68 : f32 to vector<8x150xf32>
    %560 = arith.maximumf %558, %559 : vector<8x150xf32>
    %561 = vector.extract_strided_slice %24 {offsets = [4, 0], sizes = [1, 150], strides = [1, 1]} : vector<5x150xf32> to vector<1x150xf32>
    %562 = vector.shape_cast %561 : vector<1x150xf32> to vector<150xf32>
    %563 = vector.shape_cast %562 : vector<150xf32> to vector<1x150xf32>
    %564 = vector.broadcast %563 : vector<1x150xf32> to vector<8x150xf32>
    %565 = arith.mulf %560, %564 : vector<8x150xf32>
    %566 = arith.addf %457, %565 : vector<8x150xf32>
    %567 = vector.extract_strided_slice %25 {offsets = [4, 0], sizes = [1, 150], strides = [1, 1]} : vector<5x150xf32> to vector<1x150xf32>
    %568 = vector.shape_cast %567 : vector<1x150xf32> to vector<150xf32>
    %569 = vector.shape_cast %568 : vector<150xf32> to vector<1x150xf32>
    %570 = vector.broadcast %569 : vector<1x150xf32> to vector<8x150xf32>
    %571 = arith.mulf %560, %570 : vector<8x150xf32>
    %572 = arith.addf %463, %571 : vector<8x150xf32>
    %cst_69 = arith.constant dense<0.000000e+00> : vector<8xf32>
    %573 = vector.multi_reduction <add>, %566, %cst_69 [1] : vector<8x150xf32> to vector<8xf32>
    %574 = vector.shape_cast %573 : vector<8xf32> to vector<8x1xf32>
    %cst_70 = arith.constant dense<0.000000e+00> : vector<8xf32>
    %575 = vector.multi_reduction <add>, %572, %cst_70 [1] : vector<8x150xf32> to vector<8xf32>
    %576 = vector.shape_cast %575 : vector<8xf32> to vector<8x1xf32>
    %577 = tpu.iota {dimensions = array<i32: 1>} : vector<8x2xi32>
    %c0_i32 = arith.constant 0 : i32
    %578 = vector.broadcast %c0_i32 : i32 to vector<8x2xi32>
    %579 = arith.cmpi eq, %577, %578 : vector<8x2xi32>
    %580 = vector.shape_cast %574 : vector<8x1xf32> to vector<8x1xf32>
    %581 = vector.broadcast %580 : vector<8x1xf32> to vector<8x2xf32>
    %582 = vector.shape_cast %576 : vector<8x1xf32> to vector<8x1xf32>
    %583 = vector.broadcast %582 : vector<8x1xf32> to vector<8x2xf32>
    %584 = arith.select %579, %581, %583 : vector<8x2xi1>, vector<8x2xf32>
    %c0_71 = arith.constant 0 : index
    %c0_72 = arith.constant 0 : index
    %585 = vector.load %arg6[%c0_71, %c0_72] : memref<1x2xf32, #tpu.memory_space<vmem>>, vector<1x2xf32>
    %586 = vector.broadcast %585 : vector<1x2xf32> to vector<8x2xf32>
    %587 = arith.addf %584, %586 : vector<8x2xf32>
    %cst_73 = arith.constant dense<0xFF800000> : vector<8xf32>
    %588 = vector.multi_reduction <maximumf>, %587, %cst_73 [1] : vector<8x2xf32> to vector<8xf32>
    %589 = vector.shape_cast %588 : vector<8xf32> to vector<8x1xf32>
    %590 = vector.broadcast %589 : vector<8x1xf32> to vector<8x2xf32>
    %591 = arith.subf %587, %590 : vector<8x2xf32>
    %592 = math.exp %591 : vector<8x2xf32>
    %cst_74 = arith.constant dense<0.000000e+00> : vector<8xf32>
    %593 = vector.multi_reduction <add>, %592, %cst_74 [1] : vector<8x2xf32> to vector<8xf32>
    %594 = vector.shape_cast %593 : vector<8xf32> to vector<8x1xf32>
    %595 = vector.broadcast %594 : vector<8x1xf32> to vector<8x2xf32>
    %596 = arith.divf %592, %595 : vector<8x2xf32>
    %c0_75 = arith.constant 0 : index
    %c0_76 = arith.constant 0 : index
    %597 = vector.load %arg7[%c0_75, %c0_76] : memref<8x2xf32, #tpu.memory_space<vmem>>, vector<8x2xf32>
    tpu.vector_store %arg7[%c0_75, %c0_76], %596 {strides = array<i32>} : memref<8x2xf32, #tpu.memory_space<vmem>>, vector<8x2xf32>,
    return
  }
  func.func @transform_0(%arg0: i32) -> (i32, i32, i32) {
    %c0_i32 = arith.constant 0 : i32
    %c0_i32_0 = arith.constant 0 : i32
    %c0_i32_1 = arith.constant 0 : i32
    return %c0_i32, %arg0, %c0_i32_0 : i32, i32, i32
  }
  func.func @transform_1(%arg0: i32) -> (i32, i32) {
    %c0_i32 = arith.constant 0 : i32
    %c0_i32_0 = arith.constant 0 : i32
    %c0_i32_1 = arith.constant 0 : i32
    return %c0_i32, %c0_i32_0 : i32, i32
  }
  func.func @transform_2(%arg0: i32) -> i32 {
    %c0_i32 = arith.constant 0 : i32
    %c0_i32_0 = arith.constant 0 : i32
    return %c0_i32 : i32
  }
  func.func @transform_3(%arg0: i32) -> (i32, i32) {
    %c0_i32 = arith.constant 0 : i32
    %c0_i32_0 = arith.constant 0 : i32
    %c0_i32_1 = arith.constant 0 : i32
    return %c0_i32, %c0_i32_0 : i32, i32
  }
  func.func @transform_4(%arg0: i32) -> (i32, i32) {
    %c0_i32 = arith.constant 0 : i32
    %c0_i32_0 = arith.constant 0 : i32
    %c0_i32_1 = arith.constant 0 : i32
    return %c0_i32, %c0_i32_0 : i32, i32
  }
  func.func @transform_5(%arg0: i32) -> (i32, i32) {
    %c0_i32 = arith.constant 0 : i32
    %c0_i32_0 = arith.constant 0 : i32
    %c0_i32_1 = arith.constant 0 : i32
    return %c0_i32, %c0_i32_0 : i32, i32
  }
  func.func @transform_6(%arg0: i32) -> (i32, i32) {
    %c0_i32 = arith.constant 0 : i32
    %c0_i32_0 = arith.constant 0 : i32
    return %arg0, %c0_i32 : i32, i32
  }
}

</mosaic_0001>

<llo_original>
// kernel: tpu_custom_call.1
$region0: #{tpu_custom_call.1}
  #allocation0 [shape = 'u32[]', space=smem, size = 0x4, offset = 0x4, fixed_abs, tag = 'smem constant byte address 0x4 - core index']
  #allocation1 [shape = 'u32[144,128]{1,0:T(1,128)}', space=vmem, size = 0x12000, scoped, tag = 'internal scratch']
  %s0 = inlined_call_operand.hbm [shape: f32[12,16,150], index: 0, kind: input, shape index: {}]
  %s1 = inlined_call_operand.vmem [shape: f32[5,3], index: 1, kind: input, shape index: {}]
  %s2 = inlined_call_operand.vmem [shape: f32[5], index: 2, kind: input, shape index: {}]
  %s3 = inlined_call_operand.vmem [shape: f32[5,150], index: 3, kind: input, shape index: {}]
  %s4 = inlined_call_operand.hbm [shape: f32[5,150], index: 4, kind: input, shape index: {}]
  %s5 = inlined_call_operand.vmem [shape: f32[1,2], index: 5, kind: input, shape index: {}]
  %s6 = inlined_call_operand.vmem [shape: f32[16,2], index: 6, kind: output, shape index: {}]
  %s7 = sld [smem:[#allocation0]]
  $region73: #{tpu_custom_call.1} parent=0
    _
  %s9 = ssub.s32 1, %s7
  %s10 = scalar_select 0, %s9, %s7
  $region1: #{tpu_custom_call.1} parent=0
    #allocation2 [shape = 'u8[196608]{0}', space=vmem, size = 0x30000, scoped, tag = 'input window, operand 0']
    #allocation3 [shape = 's32[2]{0}', space=sflag, size = 0x8, scoped, tag = 'scoped memory for tpu_custom_call.1']
    #allocation4 [shape = 's32[2]{0}', space=sflag, size = 0x8, scoped, tag = 'scoped memory for tpu_custom_call.1']
    #allocation5 [shape = 'u8[4096]{0}', space=smem, size = 0x1000, scoped, tag = 'input window, operand 1, single buffered']
    #allocation6 [shape = 'u8[512]{0}', space=smem, size = 0x200, scoped, tag = 'input window, operand 2, single buffered']
    #allocation7 [shape = 's32[1]{0}', space=sflag, size = 0x4, scoped, tag = 'scoped memory for tpu_custom_call.1']
    #allocation8 [shape = 'u8[8192]{0}', space=vmem, size = 0x2000, scoped, tag = 'input window, operand 4, single buffered']
    #allocation9 [shape = 's32[1]{0}', space=sflag, size = 0x4, scoped, tag = 'scoped memory for tpu_custom_call.1']
    %11 = vsyncpa [#allocation3], 0
    %s12 = scalar_lea.sflag [#allocation3], 1
    %13 = vsyncpa %s12, 0
    %14 = vsyncpa [#allocation4], 0
    %15 = vsyncpa [#allocation7], 0
    %16 = vsyncpa [#allocation9], 0
    loop: start=0, step=1, limit=4
    $region2: #{tpu_custom_call.1} parent=1 // loop_pre_header
      _
    $region3: #{tpu_custom_call.1} parent=1 // loop_header
      %s18 = sphi 0, %s22
      %p19 = scmp.ge.s32.totalorder %s18, 4
      %s28 = sphi 0, %s30
      %s31 = sphi 0, %s28
      %s32 = sphi 0, %s31
      %s48 = sphi 0, %s32
      %s52 = sphi 0, %s52
      %s54 = sphi 0, %s52
      %s55 = sphi 0, %s54
      %s69 = sphi 0, %s55
      %s73 = sphi 0, %s73
      %s75 = sphi 0, %s73
      %s76 = sphi 0, %s75
      %s90 = sphi 0, %s76
      %s94 = sphi 0, %s94
      %s96 = sphi 0, %s94
      %s97 = sphi 0, %s96
      %s111 = sphi 0, %s97
      %s115 = sphi 0, %s115
      %s117 = sphi 0, %s115
      %s118 = sphi 0, %s117
      %s132 = sphi 0, %s118
      %s136 = sphi 0, %s136
      %s138 = sphi 0, %s136
      %s139 = sphi 0, %s138
      %s153 = sphi 0, %s139
      %s159 = sphi 0, %s161
      %s162 = sphi 0, %s159
      %s163 = sphi 0, %s162
      %s179 = sphi 0, %s163
    $region4: #{tpu_custom_call.1} parent=1 // loop_header_branch
      %21 = sbr.rel (%p19) target = $region8
    $region5: #{tpu_custom_call.1} parent=1 // loop_body
      %s23 = ssub.s32 %s18, 1
      %s24 = ssub.s32 %s18, 2
      %s25 = sadd.s32 %s18, 1
      %s26 = ssub.s32 %s18, %s25
      %p27 = scmp.eq.s32.totalorder %s26, 0
      %s29 = sadd.s32 %s28, 1
      %s30 = scalar_select %p27, %s28, %s29
      %p33 = pneg %p27
      %p34 = scmp.eq.s32.totalorder %s18, 1
      %p35 = por %p33, %p34
      %p36 = scmp.ne.s32.totalorder %s28, %s31
      %p37 = scmp.eq.s32.totalorder %s18, 0
      %p38 = por %p36, %p37
      %p39 = scmp.ne.s32.totalorder %s28, %s31
      %p40 = scmp.eq.s32.totalorder %s23, 1
      %p41 = por %p39, %p40
      %p42 = scmp.ne.s32.totalorder %s31, %s32
      %p43 = scmp.eq.s32.totalorder %s23, 0
      %p44 = por %p42, %p43
      %p45 = scmp.ne.s32.totalorder %s31, %s32
      %p46 = scmp.eq.s32.totalorder %s24, 1
      %p47 = por %p45, %p46
      %p49 = scmp.ne.s32.totalorder %s32, %s48
      %p50 = scmp.eq.s32.totalorder %s24, 0
      %p51 = por %p49, %p50
      %s53 = sadd.s32 %s52, 1
      %p56 = scmp.eq.s32.totalorder %s18, 1
      %p57 = scmp.ne.s32.totalorder %s52, %s54
      %p58 = scmp.eq.s32.totalorder %s18, 0
      %p59 = por %p57, %p58
      %p60 = scmp.ne.s32.totalorder %s52, %s54
      %p61 = scmp.eq.s32.totalorder %s23, 1
      %p62 = por %p60, %p61
      %p63 = scmp.ne.s32.totalorder %s54, %s55
      %p64 = scmp.eq.s32.totalorder %s23, 0
      %p65 = por %p63, %p64
      %p66 = scmp.ne.s32.totalorder %s54, %s55
      %p67 = scmp.eq.s32.totalorder %s24, 1
      %p68 = por %p66, %p67
      %p70 = scmp.ne.s32.totalorder %s55, %s69
      %p71 = scmp.eq.s32.totalorder %s24, 0
      %p72 = por %p70, %p71
      %s74 = sadd.s32 %s73, 1
      %p77 = scmp.eq.s32.totalorder %s18, 1
      %p78 = scmp.ne.s32.totalorder %s73, %s75
      %p79 = scmp.eq.s32.totalorder %s18, 0
      %p80 = por %p78, %p79
      %p81 = scmp.ne.s32.totalorder %s73, %s75
      %p82 = scmp.eq.s32.totalorder %s23, 1
      %p83 = por %p81, %p82
      %p84 = scmp.ne.s32.totalorder %s75, %s76
      %p85 = scmp.eq.s32.totalorder %s23, 0
      %p86 = por %p84, %p85
      %p87 = scmp.ne.s32.totalorder %s75, %s76
      %p88 = scmp.eq.s32.totalorder %s24, 1
      %p89 = por %p87, %p88
      %p91 = scmp.ne.s32.totalorder %s76, %s90
      %p92 = scmp.eq.s32.totalorder %s24, 0
      %p93 = por %p91, %p92
      %s95 = sadd.s32 %s94, 1
      %p98 = scmp.eq.s32.totalorder %s18, 1
      %p99 = scmp.ne.s32.totalorder %s94, %s96
      %p100 = scmp.eq.s32.totalorder %s18, 0
      %p101 = por %p99, %p100
      %p102 = scmp.ne.s32.totalorder %s94, %s96
      %p103 = scmp.eq.s32.totalorder %s23, 1
      %p104 = por %p102, %p103
      %p105 = scmp.ne.s32.totalorder %s96, %s97
      %p106 = scmp.eq.s32.totalorder %s23, 0
      %p107 = por %p105, %p106
      %p108 = scmp.ne.s32.totalorder %s96, %s97
      %p109 = scmp.eq.s32.totalorder %s24, 1
      %p110 = por %p108, %p109
      %p112 = scmp.ne.s32.totalorder %s97, %s111
      %p113 = scmp.eq.s32.totalorder %s24, 0
      %p114 = por %p112, %p113
      %s116 = sadd.s32 %s115, 1
      %p119 = scmp.eq.s32.totalorder %s18, 1
      %p120 = scmp.ne.s32.totalorder %s115, %s117
      %p121 = scmp.eq.s32.totalorder %s18, 0
      %p122 = por %p120, %p121
      %p123 = scmp.ne.s32.totalorder %s115, %s117
      %p124 = scmp.eq.s32.totalorder %s23, 1
      %p125 = por %p123, %p124
      %p126 = scmp.ne.s32.totalorder %s117, %s118
      %p127 = scmp.eq.s32.totalorder %s23, 0
      %p128 = por %p126, %p127
      %p129 = scmp.ne.s32.totalorder %s117, %s118
      %p130 = scmp.eq.s32.totalorder %s24, 1
      %p131 = por %p129, %p130
      %p133 = scmp.ne.s32.totalorder %s118, %s132
      %p134 = scmp.eq.s32.totalorder %s24, 0
      %p135 = por %p133, %p134
      %s137 = sadd.s32 %s136, 1
      %p140 = scmp.eq.s32.totalorder %s18, 1
      %p141 = scmp.ne.s32.totalorder %s136, %s138
      %p142 = scmp.eq.s32.totalorder %s18, 0
      %p143 = por %p141, %p142
      %p144 = scmp.ne.s32.totalorder %s136, %s138
      %p145 = scmp.eq.s32.totalorder %s23, 1
      %p146 = por %p144, %p145
      %p147 = scmp.ne.s32.totalorder %s138, %s139
      %p148 = scmp.eq.s32.totalorder %s23, 0
      %p149 = por %p147, %p148
      %p150 = scmp.ne.s32.totalorder %s138, %s139
      %p151 = scmp.eq.s32.totalorder %s24, 1
      %p152 = por %p150, %p151
      %p154 = scmp.ne.s32.totalorder %s139, %s153
      %p155 = scmp.eq.s32.totalorder %s24, 0
      %p156 = por %p154, %p155
      %s157 = ssub.s32 %s18, %s25
      %p158 = scmp.eq.s32.totalorder %s157, 0
      %s160 = sadd.s32 %s159, 1
      %s161 = scalar_select %p158, %s159, %s160
      %p164 = pneg %p158
      %p165 = scmp.eq.s32.totalorder %s18, 1
      %p166 = por %p164, %p165
      %p167 = scmp.ne.s32.totalorder %s159, %s162
      %p168 = scmp.eq.s32.totalorder %s18, 0
      %p169 = por %p167, %p168
      %p170 = scmp.ne.s32.totalorder %s159, %s162
      %p171 = scmp.eq.s32.totalorder %s23, 1
      %p172 = por %p170, %p171
      %p173 = scmp.ne.s32.totalorder %s162, %s163
      %p174 = scmp.eq.s32.totalorder %s23, 0
      %p175 = por %p173, %p174
      %p176 = scmp.ne.s32.totalorder %s162, %s163
      %p177 = scmp.eq.s32.totalorder %s24, 1
      %p178 = por %p176, %p177
      %p180 = scmp.ne.s32.totalorder %s163, %s179
      %p181 = scmp.eq.s32.totalorder %s24, 0
      %p182 = por %p180, %p181
      %p183 = scmp.le.s32.totalorder 1, %s18
      %p184 = scmp.lt.s32.totalorder %s18, 3
      %p185 = pnand %p183, %p184
      %p186 = pneg %p185
      // Predicated region
      $region9: #{tpu_custom_call.1} parent=5 // pred_check
        _
      $region10: #{tpu_custom_call.1} parent=5 // pred_check_branch
        %188 = sbr.rel (%p185) target = $region12
      $region11: #{tpu_custom_call.1} parent=5 // pred_region
        %s189 = ssub.s32 %s18, 1
        // Predicated region
        $region13: #{tpu_custom_call.1} parent=11 // pred_check
          %p190 = pneg %p65
        $region14: #{tpu_custom_call.1} parent=11 // pred_check_branch
          %192 = sbr.rel (%p190) target = $region16
        $region15: #{tpu_custom_call.1} parent=11 // pred_region
          %s194 = ssub.s32 128, 128
          %195 = vsyncadd [#allocation4], %s194
          %s197 = sshll.u32 %s1, 4
          %s198 = int_to_ptr.vmem [resolvable:$true] %s197
          %200 = dma.vmem_to_smem %s198, 128, [#allocation5], [#allocation4]
        $region16: #{tpu_custom_call.1} parent=11 // pred_fallthru
          _
        // Predicated region
        $region17: #{tpu_custom_call.1} parent=11 // pred_check
          %p201 = pneg %p86
        $region18: #{tpu_custom_call.1} parent=11 // pred_check_branch
          %203 = sbr.rel (%p201) target = $region20
        $region19: #{tpu_custom_call.1} parent=11 // pred_region
          %s205 = ssub.s32 16, 16
          %206 = vsyncadd [#allocation7], %s205
          %s208 = sshll.u32 %s2, 4
          %s209 = int_to_ptr.vmem [resolvable:$true] %s208
          %211 = dma.vmem_to_smem %s209, 16, [#allocation6], [#allocation7]
        $region20: #{tpu_custom_call.1} parent=11 // pred_fallthru
          _
        // Predicated region
        $region21: #{tpu_custom_call.1} parent=11 // pred_check
          %p212 = pneg %p107
        $region22: #{tpu_custom_call.1} parent=11 // pred_check_branch
          %214 = sbr.rel (%p212) target = $region24
        $region23: #{tpu_custom_call.1} parent=11 // pred_region
          _
        $region24: #{tpu_custom_call.1} parent=11 // pred_fallthru
          _
        // Predicated region
        $region25: #{tpu_custom_call.1} parent=11 // pred_check
          %p215 = pneg %p128
        $region26: #{tpu_custom_call.1} parent=11 // pred_check_branch
          %217 = sbr.rel (%p215) target = $region28
        $region27: #{tpu_custom_call.1} parent=11 // pred_region
          %s219 = ssub.s32 256, 256
          %220 = vsyncadd [#allocation9], %s219
          %s222 = sshll.u32 [#allocation8], 4
          %s223 = int_to_ptr.vmem [resolvable:$true] %s222
          %225 = dma.hbm_to_vmem [thread:$0]  %s4, 256, %s223, [#allocation9]
        $region28: #{tpu_custom_call.1} parent=11 // pred_fallthru
          _
        // Predicated region
        $region29: #{tpu_custom_call.1} parent=11 // pred_check
          %p226 = pneg %p149
        $region30: #{tpu_custom_call.1} parent=11 // pred_check_branch
          %228 = sbr.rel (%p226) target = $region32
        $region31: #{tpu_custom_call.1} parent=11 // pred_region
          _
        $region32: #{tpu_custom_call.1} parent=11 // pred_fallthru
          _
      $region12: #{tpu_custom_call.1} parent=5 // pred_fallthru
        _
      %p229 = scmp.lt.s32.totalorder %s18, 2
      // Predicated region
      $region33: #{tpu_custom_call.1} parent=5 // pred_check
        %p230 = pneg %p229
      $region34: #{tpu_custom_call.1} parent=5 // pred_check_branch
        %232 = sbr.rel (%p230) target = $region36
      $region35: #{tpu_custom_call.1} parent=5 // pred_region
        // Predicated region
        $region37: #{tpu_custom_call.1} parent=35 // pred_check
          %p233 = pneg %p38
        $region38: #{tpu_custom_call.1} parent=35 // pred_check_branch
          %235 = sbr.rel (%p233) target = $region40
        $region39: #{tpu_custom_call.1} parent=35 // pred_region
          %s236 = sand.u32 %s28, 1
          %s237 = scalar_lea.sflag [#allocation3], %s236
          %s238 = sand.u32 %s28, 1
          %s239 = smul.addr %s238, 192
          %s240 = scalar_lea.vmem [#allocation2], %s239
          %s242 = ssub.s32 3072, 3072
          %243 = vsyncadd %s237, %s242
          %s244 = smul.addr %s18, 2
          %s245 = smul.addr %s244, 128
          %s246 = scalar_lea.hbm %s0, %s245
          %s247 = sshll.u32 %s240, 4
          %s248 = int_to_ptr.vmem [resolvable:$true] %s247
          %253 = dma.hbm_to_vmem [thread:$0]  %s246, 3072, %s248, %s237, 512, 256, 16
        $region40: #{tpu_custom_call.1} parent=35 // pred_fallthru
          _
      $region36: #{tpu_custom_call.1} parent=5 // pred_fallthru
        _
      %p254 = scmp.le.s32.totalorder 1, %s18
      %p255 = scmp.lt.s32.totalorder %s18, 3
      %p256 = pnand %p254, %p255
      %p257 = pneg %p256
      // Predicated region
      $region41: #{tpu_custom_call.1} parent=5 // pred_check
        _
      $region42: #{tpu_custom_call.1} parent=5 // pred_check_branch
        %259 = sbr.rel (%p256) target = $region44
      $region43: #{tpu_custom_call.1} parent=5 // pred_region
        %s260 = ssub.s32 %s18, 1
        %s261 = sand.u32 %s31, 1
        %s262 = scalar_lea.sflag [#allocation3], %s261
        %s263 = sand.u32 %s31, 1
        %s264 = smul.addr %s263, 192
        %s265 = scalar_lea.vmem [#allocation2], %s264
        // Predicated region
        $region45: #{tpu_custom_call.1} parent=43 // pred_check
          %p266 = pneg %p44
        $region46: #{tpu_custom_call.1} parent=43 // pred_check_branch
          %268 = sbr.rel (%p266) target = $region48
        $region47: #{tpu_custom_call.1} parent=43 // pred_region
          %269 = dma.done %s262, 3072
        $region48: #{tpu_custom_call.1} parent=43 // pred_fallthru
          _
        // Predicated region
        $region49: #{tpu_custom_call.1} parent=43 // pred_check
          %p270 = pneg %p65
        $region50: #{tpu_custom_call.1} parent=43 // pred_check_branch
          %272 = sbr.rel (%p270) target = $region52
        $region51: #{tpu_custom_call.1} parent=43 // pred_region
          %273 = dma.done [#allocation4], 128
        $region52: #{tpu_custom_call.1} parent=43 // pred_fallthru
          _
        // Predicated region
        $region53: #{tpu_custom_call.1} parent=43 // pred_check
          %p274 = pneg %p86
        $region54: #{tpu_custom_call.1} parent=43 // pred_check_branch
          %276 = sbr.rel (%p274) target = $region56
        $region55: #{tpu_custom_call.1} parent=43 // pred_region
          %277 = dma.done [#allocation7], 16
        $region56: #{tpu_custom_call.1} parent=43 // pred_fallthru
          _
        // Predicated region
        $region57: #{tpu_custom_call.1} parent=43 // pred_check
          %p278 = pneg %p128
        $region58: #{tpu_custom_call.1} parent=43 // pred_check_branch
          %280 = sbr.rel (%p278) target = $region60
        $region59: #{tpu_custom_call.1} parent=43 // pred_region
          %281 = dma.done [#allocation9], 256
        $region60: #{tpu_custom_call.1} parent=43 // pred_fallthru
          _
        %282 = sfence
        %s283 = sand.u32 %s31, 1
        %s284 = scalar_lea.sflag [#allocation3], %s283
        %s285 = sand.u32 %s31, 1
        %s286 = smul.addr %s285, 192
        %s287 = scalar_lea.vmem [#allocation2], %s286
        %p288 = pneg %p44
        %p289 = pneg %p41
        %p290 = pneg %p65
        %p291 = pneg %p62
        %p292 = pneg %p86
        %p293 = pneg %p83
        %p294 = pneg %p107
        %p295 = pneg %p104
        %p296 = pneg %p128
        %p297 = pneg %p125
        %p298 = pneg %p149
        %p299 = pneg %p146
        %p300 = pneg %p175
        %p301 = pneg %p172
        %p302 = scmp.lt.s32.totalorder %s23, 1
        %s303 = scalar_select %p302, %s23, 1
        %s304 = smul.addr %s303, 8
        %s305 = scalar_lea.vmem %s6, %s304
        %p306 = scmp.lt.s32.totalorder %s23, 1
        %s307 = scalar_select %p306, %s23, 1
        %s308 = smul.addr %s307, 8
        %s309 = scalar_lea.vmem %s6, %s308
        %v310 = vld [vmem:[%s265] sm:$0xff]
        %v311 = vld [vmem:[%s265 + $0x8] sm:$0xff]
        %s312 = scalar_lea.vmem %s265, 16 [#allocation2]
        %v313 = vld [vmem:[%s312] sm:$0xff]
        %v314 = vld [vmem:[%s312 + $0x8] sm:$0xff]
        %s315 = scalar_lea.vmem %s265, 32 [#allocation2]
        %v316 = vld [vmem:[%s315] sm:$0xff]
        %v317 = vld [vmem:[%s315 + $0x8] sm:$0xff]
        %s318 = scalar_lea.vmem %s265, 48 [#allocation2]
        %v319 = vld [vmem:[%s318] sm:$0xff]
        %v320 = vld [vmem:[%s318 + $0x8] sm:$0xff]
        %s321 = scalar_lea.vmem %s265, 64 [#allocation2]
        %v322 = vld [vmem:[%s321] sm:$0xff]
        %v323 = vld [vmem:[%s321 + $0x8] sm:$0xff]
        %s324 = scalar_lea.vmem %s265, 80 [#allocation2]
        %v325 = vld [vmem:[%s324] sm:$0xff]
        %v326 = vld [vmem:[%s324 + $0x8] sm:$0xff]
        %s327 = scalar_lea.vmem %s265, 96 [#allocation2]
        %v328 = vld [vmem:[%s327] sm:$0xff]
        %v329 = vld [vmem:[%s327 + $0x8] sm:$0xff]
        %s330 = scalar_lea.vmem %s265, 112 [#allocation2]
        %v331 = vld [vmem:[%s330] sm:$0xff]
        %v332 = vld [vmem:[%s330 + $0x8] sm:$0xff]
        %s333 = scalar_lea.vmem %s265, 128 [#allocation2]
        %v334 = vld [vmem:[%s333] sm:$0xff]
        %v335 = vld [vmem:[%s333 + $0x8] sm:$0xff]
        %s336 = scalar_lea.vmem %s265, 144 [#allocation2]
        %v337 = vld [vmem:[%s336] sm:$0xff]
        %v338 = vld [vmem:[%s336 + $0x8] sm:$0xff]
        %s339 = scalar_lea.vmem %s265, 160 [#allocation2]
        %v340 = vld [vmem:[%s339] sm:$0xff]
        %v341 = vld [vmem:[%s339 + $0x8] sm:$0xff]
        %s342 = scalar_lea.vmem %s265, 176 [#allocation2]
        %v343 = vld [vmem:[%s342] sm:$0xff]
        %v344 = vld [vmem:[%s342 + $0x8] sm:$0xff]
        %v345 = vld [vmem:[%s3] sm:$0x1f]
        %v346 = vld [vmem:[%s3 + $0x8] sm:$0x1f]
        %v347 = vld [vmem:[#allocation8] sm:$0x1f]
        %v348 = vld [vmem:[#allocation8 + $0x8] sm:$0x1f]
        %s349 = sld [smem:[#allocation5]]
        %s350 = sld [smem:[#allocation5 + $0x1]]
        %s351 = sld [smem:[#allocation5 + $0x2]]
        %v352 = vstv %s349
        %v353 = vmul.f32 %v352, %v310
        %v354 = vmul.f32 %v352, %v311
        %v355 = vstv %s350
        %v356 = vmul.f32 %v355, %v313
        %v357 = vmul.f32 %v355, %v314
        %v358 = vadd.f32 %v353, %v356
        %v359 = vadd.f32 %v354, %v357
        %v360 = vstv %s351
        %v361 = vmul.f32 %v360, %v316
        %v362 = vmul.f32 %v360, %v317
        %v363 = vadd.f32 %v358, %v361
        %v364 = vadd.f32 %v359, %v362
        %v365 = vmul.f32 %v352, %v313
        %v366 = vmul.f32 %v352, %v314
        %v367 = vmul.f32 %v355, %v316
        %v368 = vmul.f32 %v355, %v317
        %v369 = vadd.f32 %v365, %v367
        %v370 = vadd.f32 %v366, %v368
        %v371 = vmul.f32 %v360, %v319
        %v372 = vmul.f32 %v360, %v320
        %v373 = vadd.f32 %v369, %v371
        %v374 = vadd.f32 %v370, %v372
        %v375 = vmax.f32 %v363, %v373
        %v376 = vmax.f32 %v364, %v374
        %v377 = vmul.f32 %v352, %v316
        %v378 = vmul.f32 %v352, %v317
        %v379 = vmul.f32 %v355, %v319
        %v380 = vmul.f32 %v355, %v320
        %v381 = vadd.f32 %v377, %v379
        %v382 = vadd.f32 %v378, %v380
        %v383 = vmul.f32 %v360, %v322
        %v384 = vmul.f32 %v360, %v323
        %v385 = vadd.f32 %v381, %v383
        %v386 = vadd.f32 %v382, %v384
        %v387 = vmax.f32 %v375, %v385
        %v388 = vmax.f32 %v376, %v386
        %v389 = vmul.f32 %v352, %v319
        %v390 = vmul.f32 %v352, %v320
        %v391 = vmul.f32 %v355, %v322
        %v392 = vmul.f32 %v355, %v323
        %v393 = vadd.f32 %v389, %v391
        %v394 = vadd.f32 %v390, %v392
        %v395 = vmul.f32 %v360, %v325
        %v396 = vmul.f32 %v360, %v326
        %v397 = vadd.f32 %v393, %v395
        %v398 = vadd.f32 %v394, %v396
        %v399 = vmax.f32 %v387, %v397
        %v400 = vmax.f32 %v388, %v398
        %v401 = vmul.f32 %v352, %v322
        %v402 = vmul.f32 %v352, %v323
        %v403 = vmul.f32 %v355, %v325
        %v404 = vmul.f32 %v355, %v326
        %v405 = vadd.f32 %v401, %v403
        %v406 = vadd.f32 %v402, %v404
        %v407 = vmul.f32 %v360, %v328
        %v408 = vmul.f32 %v360, %v329
        %v409 = vadd.f32 %v405, %v407
        %v410 = vadd.f32 %v406, %v408
        %v411 = vmax.f32 %v399, %v409
        %v412 = vmax.f32 %v400, %v410
        %v413 = vmul.f32 %v352, %v325
        %v414 = vmul.f32 %v352, %v326
        %v415 = vmul.f32 %v355, %v328
        %v416 = vmul.f32 %v355, %v329
        %v417 = vadd.f32 %v413, %v415
        %v418 = vadd.f32 %v414, %v416
        %v419 = vmul.f32 %v360, %v331
        %v420 = vmul.f32 %v360, %v332
        %v421 = vadd.f32 %v417, %v419
        %v422 = vadd.f32 %v418, %v420
        %v423 = vmax.f32 %v411, %v421
        %v424 = vmax.f32 %v412, %v422
        %v425 = vmul.f32 %v352, %v328
        %v426 = vmul.f32 %v352, %v329
        %v427 = vmul.f32 %v355, %v331
        %v428 = vmul.f32 %v355, %v332
        %v429 = vadd.f32 %v425, %v427
        %v430 = vadd.f32 %v426, %v428
        %v431 = vmul.f32 %v360, %v334
        %v432 = vmul.f32 %v360, %v335
        %v433 = vadd.f32 %v429, %v431
        %v434 = vadd.f32 %v430, %v432
        %v435 = vmax.f32 %v423, %v433
        %v436 = vmax.f32 %v424, %v434
        %v437 = vmul.f32 %v352, %v331
        %v438 = vmul.f32 %v352, %v332
        %v439 = vmul.f32 %v355, %v334
        %v440 = vmul.f32 %v355, %v335
        %v441 = vadd.f32 %v437, %v439
        %v442 = vadd.f32 %v438, %v440
        %v443 = vmul.f32 %v360, %v337
        %v444 = vmul.f32 %v360, %v338
        %v445 = vadd.f32 %v441, %v443
        %v446 = vadd.f32 %v442, %v444
        %v447 = vmax.f32 %v435, %v445
        %v448 = vmax.f32 %v436, %v446
        %v449 = vmul.f32 %v352, %v334
        %v450 = vmul.f32 %v352, %v335
        %v451 = vmul.f32 %v355, %v337
        %v452 = vmul.f32 %v355, %v338
        %v453 = vadd.f32 %v449, %v451
        %v454 = vadd.f32 %v450, %v452
        %v455 = vmul.f32 %v360, %v340
        %v456 = vmul.f32 %v360, %v341
        %v457 = vadd.f32 %v453, %v455
        %v458 = vadd.f32 %v454, %v456
        %v459 = vmax.f32 %v447, %v457
        %v460 = vmax.f32 %v448, %v458
        %v461 = vmul.f32 %v352, %v337
        %v462 = vmul.f32 %v352, %v338
        %v463 = vmul.f32 %v355, %v340
        %v464 = vmul.f32 %v355, %v341
        %v465 = vadd.f32 %v461, %v463
        %v466 = vadd.f32 %v462, %v464
        %v467 = vmul.f32 %v360, %v343
        %v468 = vmul.f32 %v360, %v344
        %v469 = vadd.f32 %v465, %v467
        %v470 = vadd.f32 %v466, %v468
        %v471 = vmax.f32 %v459, %v469
        %v472 = vmax.f32 %v460, %v470
        %s473 = sld [smem:[#allocation6]]
        %v474 = vstv %s473
        %v475 = vadd.f32 %v471, %v474
        %v476 = vadd.f32 %v472, %v474
        %v477 = vmax.f32 %v475, 0.0
        %v478 = vmax.f32 %v476, 0.0
        %v479 = vlaneseq
        %v480 = vshrl.u32 %v479, 7
        %v481 = vsub.s32 0, %v480
        %v482 = vrot.slane %v345, %v481
        %v483 = vlaneseq
        %v484 = vshrl.u32 %v483, 7
        %v485 = vsub.s32 0, %v484
        %v486 = vrot.slane %v346, %v485
        %v487 = vmul.f32 %v477, %v482
        %v488 = vmul.f32 %v478, %v486
        %v489 = vadd.f32 %v487, 0.0
        %v490 = vadd.f32 %v488, 0.0
        %v491 = vlaneseq
        %v492 = vshrl.u32 %v491, 7
        %v493 = vsub.s32 0, %v492
        %v494 = vrot.slane %v347, %v493
        %v495 = vlaneseq
        %v496 = vshrl.u32 %v495, 7
        %v497 = vsub.s32 0, %v496
        %v498 = vrot.slane %v348, %v497
        %v499 = vmul.f32 %v477, %v494
        %v500 = vmul.f32 %v478, %v498
        %v501 = vadd.f32 %v499, 0.0
        %v502 = vadd.f32 %v500, 0.0
        %s503 = sld [smem:[#allocation5 + $0x80]]
        %s504 = sld [smem:[#allocation5 + $0x81]]
        %s505 = sld [smem:[#allocation5 + $0x82]]
        %v506 = vstv %s503
        %v507 = vmul.f32 %v506, %v310
        %v508 = vmul.f32 %v506, %v311
        %v509 = vstv %s504
        %v510 = vmul.f32 %v509, %v313
        %v511 = vmul.f32 %v509, %v314
        %v512 = vadd.f32 %v507, %v510
        %v513 = vadd.f32 %v508, %v511
        %v514 = vstv %s505
        %v515 = vmul.f32 %v514, %v316
        %v516 = vmul.f32 %v514, %v317
        %v517 = vadd.f32 %v512, %v515
        %v518 = vadd.f32 %v513, %v516
        %v519 = vmul.f32 %v506, %v313
        %v520 = vmul.f32 %v506, %v314
        %v521 = vmul.f32 %v509, %v316
        %v522 = vmul.f32 %v509, %v317
        %v523 = vadd.f32 %v519, %v521
        %v524 = vadd.f32 %v520, %v522
        %v525 = vmul.f32 %v514, %v319
        %v526 = vmul.f32 %v514, %v320
        %v527 = vadd.f32 %v523, %v525
        %v528 = vadd.f32 %v524, %v526
        %v529 = vmax.f32 %v517, %v527
        %v530 = vmax.f32 %v518, %v528
        %v531 = vmul.f32 %v506, %v316
        %v532 = vmul.f32 %v506, %v317
        %v533 = vmul.f32 %v509, %v319
        %v534 = vmul.f32 %v509, %v320
        %v535 = vadd.f32 %v531, %v533
        %v536 = vadd.f32 %v532, %v534
        %v537 = vmul.f32 %v514, %v322
        %v538 = vmul.f32 %v514, %v323
        %v539 = vadd.f32 %v535, %v537
        %v540 = vadd.f32 %v536, %v538
        %v541 = vmax.f32 %v529, %v539
        %v542 = vmax.f32 %v530, %v540
        %v543 = vmul.f32 %v506, %v319
        %v544 = vmul.f32 %v506, %v320
        %v545 = vmul.f32 %v509, %v322
        %v546 = vmul.f32 %v509, %v323
        %v547 = vadd.f32 %v543, %v545
        %v548 = vadd.f32 %v544, %v546
        %v549 = vmul.f32 %v514, %v325
        %v550 = vmul.f32 %v514, %v326
        %v551 = vadd.f32 %v547, %v549
        %v552 = vadd.f32 %v548, %v550
        %v553 = vmax.f32 %v541, %v551
        %v554 = vmax.f32 %v542, %v552
        %v555 = vmul.f32 %v506, %v322
        %v556 = vmul.f32 %v506, %v323
        %v557 = vmul.f32 %v509, %v325
        %v558 = vmul.f32 %v509, %v326
        %v559 = vadd.f32 %v555, %v557
        %v560 = vadd.f32 %v556, %v558
        %v561 = vmul.f32 %v514, %v328
        %v562 = vmul.f32 %v514, %v329
        %v563 = vadd.f32 %v559, %v561
        %v564 = vadd.f32 %v560, %v562
        %v565 = vmax.f32 %v553, %v563
        %v566 = vmax.f32 %v554, %v564
        %v567 = vmul.f32 %v506, %v325
        %v568 = vmul.f32 %v506, %v326
        %v569 = vmul.f32 %v509, %v328
        %v570 = vmul.f32 %v509, %v329
        %v571 = vadd.f32 %v567, %v569
        %v572 = vadd.f32 %v568, %v570
        %v573 = vmul.f32 %v514, %v331
        %v574 = vmul.f32 %v514, %v332
        %v575 = vadd.f32 %v571, %v573
        %v576 = vadd.f32 %v572, %v574
        %v577 = vmax.f32 %v565, %v575
        %v578 = vmax.f32 %v566, %v576
        %v579 = vmul.f32 %v506, %v328
        %v580 = vmul.f32 %v506, %v329
        %v581 = vmul.f32 %v509, %v331
        %v582 = vmul.f32 %v509, %v332
        %v583 = vadd.f32 %v579, %v581
        %v584 = vadd.f32 %v580, %v582
        %v585 = vmul.f32 %v514, %v334
        %v586 = vmul.f32 %v514, %v335
        %v587 = vadd.f32 %v583, %v585
        %v588 = vadd.f32 %v584, %v586
        %v589 = vmax.f32 %v577, %v587
        %v590 = vmax.f32 %v578, %v588
        %v591 = vmul.f32 %v506, %v331
        %v592 = vmul.f32 %v506, %v332
        %v593 = vmul.f32 %v509, %v334
        %v594 = vmul.f32 %v509, %v335
        %v595 = vadd.f32 %v591, %v593
        %v596 = vadd.f32 %v592, %v594
        %v597 = vmul.f32 %v514, %v337
        %v598 = vmul.f32 %v514, %v338
        %v599 = vadd.f32 %v595, %v597
        %v600 = vadd.f32 %v596, %v598
        %v601 = vmax.f32 %v589, %v599
        %v602 = vmax.f32 %v590, %v600
        %v603 = vmul.f32 %v506, %v334
        %v604 = vmul.f32 %v506, %v335
        %v605 = vmul.f32 %v509, %v337
        %v606 = vmul.f32 %v509, %v338
        %v607 = vadd.f32 %v603, %v605
        %v608 = vadd.f32 %v604, %v606
        %v609 = vmul.f32 %v514, %v340
        %v610 = vmul.f32 %v514, %v341
        %v611 = vadd.f32 %v607, %v609
        %v612 = vadd.f32 %v608, %v610
        %v613 = vmax.f32 %v601, %v611
        %v614 = vmax.f32 %v602, %v612
        %v615 = vmul.f32 %v506, %v337
        %v616 = vmul.f32 %v506, %v338
        %v617 = vmul.f32 %v509, %v340
        %v618 = vmul.f32 %v509, %v341
        %v619 = vadd.f32 %v615, %v617
        %v620 = vadd.f32 %v616, %v618
        %v621 = vmul.f32 %v514, %v343
        %v622 = vmul.f32 %v514, %v344
        %v623 = vadd.f32 %v619, %v621
        %v624 = vadd.f32 %v620, %v622
        %v625 = vmax.f32 %v613, %v623
        %v626 = vmax.f32 %v614, %v624
        %s627 = sld [smem:[#allocation6 + $0x1]]
        %v628 = vstv %s627
        %v629 = vadd.f32 %v625, %v628
        %v630 = vadd.f32 %v626, %v628
        %v631 = vmax.f32 %v629, 0.0
        %v632 = vmax.f32 %v630, 0.0
        %v633 = vlaneseq
        %v634 = vshrl.u32 %v633, 7
        %v635 = vsub.s32 1, %v634
        %v636 = vrot.slane %v345, %v635
        %v637 = vlaneseq
        %v638 = vshrl.u32 %v637, 7
        %v639 = vsub.s32 1, %v638
        %v640 = vrot.slane %v346, %v639
        %v641 = vmul.f32 %v631, %v636
        %v642 = vmul.f32 %v632, %v640
        %v643 = vadd.f32 %v489, %v641
        %v644 = vadd.f32 %v490, %v642
        %v645 = vlaneseq
        %v646 = vshrl.u32 %v645, 7
        %v647 = vsub.s32 1, %v646
        %v648 = vrot.slane %v347, %v647
        %v649 = vlaneseq
        %v650 = vshrl.u32 %v649, 7
        %v651 = vsub.s32 1, %v650
        %v652 = vrot.slane %v348, %v651
        %v653 = vmul.f32 %v631, %v648
        %v654 = vmul.f32 %v632, %v652
        %v655 = vadd.f32 %v501, %v653
        %v656 = vadd.f32 %v502, %v654
        %s657 = sld [smem:[#allocation5 + $0x100]]
        %s658 = sld [smem:[#allocation5 + $0x101]]
        %s659 = sld [smem:[#allocation5 + $0x102]]
        %v660 = vstv %s657
        %v661 = vmul.f32 %v660, %v310
        %v662 = vmul.f32 %v660, %v311
        %v663 = vstv %s658
        %v664 = vmul.f32 %v663, %v313
        %v665 = vmul.f32 %v663, %v314
        %v666 = vadd.f32 %v661, %v664
        %v667 = vadd.f32 %v662, %v665
        %v668 = vstv %s659
        %v669 = vmul.f32 %v668, %v316
        %v670 = vmul.f32 %v668, %v317
        %v671 = vadd.f32 %v666, %v669
        %v672 = vadd.f32 %v667, %v670
        %v673 = vmul.f32 %v660, %v313
        %v674 = vmul.f32 %v660, %v314
        %v675 = vmul.f32 %v663, %v316
        %v676 = vmul.f32 %v663, %v317
        %v677 = vadd.f32 %v673, %v675
        %v678 = vadd.f32 %v674, %v676
        %v679 = vmul.f32 %v668, %v319
        %v680 = vmul.f32 %v668, %v320
        %v681 = vadd.f32 %v677, %v679
        %v682 = vadd.f32 %v678, %v680
        %v683 = vmax.f32 %v671, %v681
        %v684 = vmax.f32 %v672, %v682
        %v685 = vmul.f32 %v660, %v316
        %v686 = vmul.f32 %v660, %v317
        %v687 = vmul.f32 %v663, %v319
        %v688 = vmul.f32 %v663, %v320
        %v689 = vadd.f32 %v685, %v687
        %v690 = vadd.f32 %v686, %v688
        %v691 = vmul.f32 %v668, %v322
        %v692 = vmul.f32 %v668, %v323
        %v693 = vadd.f32 %v689, %v691
        %v694 = vadd.f32 %v690, %v692
        %v695 = vmax.f32 %v683, %v693
        %v696 = vmax.f32 %v684, %v694
        %v697 = vmul.f32 %v660, %v319
        %v698 = vmul.f32 %v660, %v320
        %v699 = vmul.f32 %v663, %v322
        %v700 = vmul.f32 %v663, %v323
        %v701 = vadd.f32 %v697, %v699
        %v702 = vadd.f32 %v698, %v700
        %v703 = vmul.f32 %v668, %v325
        %v704 = vmul.f32 %v668, %v326
        %v705 = vadd.f32 %v701, %v703
        %v706 = vadd.f32 %v702, %v704
        %v707 = vmax.f32 %v695, %v705
        %v708 = vmax.f32 %v696, %v706
        %v709 = vmul.f32 %v660, %v322
        %v710 = vmul.f32 %v660, %v323
        %v711 = vmul.f32 %v663, %v325
        %v712 = vmul.f32 %v663, %v326
        %v713 = vadd.f32 %v709, %v711
        %v714 = vadd.f32 %v710, %v712
        %v715 = vmul.f32 %v668, %v328
        %v716 = vmul.f32 %v668, %v329
        %v717 = vadd.f32 %v713, %v715
        %v718 = vadd.f32 %v714, %v716
        %v719 = vmax.f32 %v707, %v717
        %v720 = vmax.f32 %v708, %v718
        %v721 = vmul.f32 %v660, %v325
        %v722 = vmul.f32 %v660, %v326
        %v723 = vmul.f32 %v663, %v328
        %v724 = vmul.f32 %v663, %v329
        %v725 = vadd.f32 %v721, %v723
        %v726 = vadd.f32 %v722, %v724
        %v727 = vmul.f32 %v668, %v331
        %v728 = vmul.f32 %v668, %v332
        %v729 = vadd.f32 %v725, %v727
        %v730 = vadd.f32 %v726, %v728
        %v731 = vmax.f32 %v719, %v729
        %v732 = vmax.f32 %v720, %v730
        %v733 = vmul.f32 %v660, %v328
        %v734 = vmul.f32 %v660, %v329
        %v735 = vmul.f32 %v663, %v331
        %v736 = vmul.f32 %v663, %v332
        %v737 = vadd.f32 %v733, %v735
        %v738 = vadd.f32 %v734, %v736
        %v739 = vmul.f32 %v668, %v334
        %v740 = vmul.f32 %v668, %v335
        %v741 = vadd.f32 %v737, %v739
        %v742 = vadd.f32 %v738, %v740
        %v743 = vmax.f32 %v731, %v741
        %v744 = vmax.f32 %v732, %v742
        %v745 = vmul.f32 %v660, %v331
        %v746 = vmul.f32 %v660, %v332
        %v747 = vmul.f32 %v663, %v334
        %v748 = vmul.f32 %v663, %v335
        %v749 = vadd.f32 %v745, %v747
        %v750 = vadd.f32 %v746, %v748
        %v751 = vmul.f32 %v668, %v337
        %v752 = vmul.f32 %v668, %v338
        %v753 = vadd.f32 %v749, %v751
        %v754 = vadd.f32 %v750, %v752
        %v755 = vmax.f32 %v743, %v753
        %v756 = vmax.f32 %v744, %v754
        %v757 = vmul.f32 %v660, %v334
        %v758 = vmul.f32 %v660, %v335
        %v759 = vmul.f32 %v663, %v337
        %v760 = vmul.f32 %v663, %v338
        %v761 = vadd.f32 %v757, %v759
        %v762 = vadd.f32 %v758, %v760
        %v763 = vmul.f32 %v668, %v340
        %v764 = vmul.f32 %v668, %v341
        %v765 = vadd.f32 %v761, %v763
        %v766 = vadd.f32 %v762, %v764
        %v767 = vmax.f32 %v755, %v765
        %v768 = vmax.f32 %v756, %v766
        %v769 = vmul.f32 %v660, %v337
        %v770 = vmul.f32 %v660, %v338
        %v771 = vmul.f32 %v663, %v340
        %v772 = vmul.f32 %v663, %v341
        %v773 = vadd.f32 %v769, %v771
        %v774 = vadd.f32 %v770, %v772
        %v775 = vmul.f32 %v668, %v343
        %v776 = vmul.f32 %v668, %v344
        %v777 = vadd.f32 %v773, %v775
        %v778 = vadd.f32 %v774, %v776
        %v779 = vmax.f32 %v767, %v777
        %v780 = vmax.f32 %v768, %v778
        %s781 = sld [smem:[#allocation6 + $0x2]]
        %v782 = vstv %s781
        %v783 = vadd.f32 %v779, %v782
        %v784 = vadd.f32 %v780, %v782
        %v785 = vmax.f32 %v783, 0.0
        %v786 = vmax.f32 %v784, 0.0
        %v787 = vlaneseq
        %v788 = vshrl.u32 %v787, 7
        %v789 = vsub.s32 2, %v788
        %v790 = vrot.slane %v345, %v789
        %v791 = vlaneseq
        %v792 = vshrl.u32 %v791, 7
        %v793 = vsub.s32 2, %v792
        %v794 = vrot.slane %v346, %v793
        %v795 = vmul.f32 %v785, %v790
        %v796 = vmul.f32 %v786, %v794
        %v797 = vadd.f32 %v643, %v795
        %v798 = vadd.f32 %v644, %v796
        %v799 = vlaneseq
        %v800 = vshrl.u32 %v799, 7
        %v801 = vsub.s32 2, %v800
        %v802 = vrot.slane %v347, %v801
        %v803 = vlaneseq
        %v804 = vshrl.u32 %v803, 7
        %v805 = vsub.s32 2, %v804
        %v806 = vrot.slane %v348, %v805
        %v807 = vmul.f32 %v785, %v802
        %v808 = vmul.f32 %v786, %v806
        %v809 = vadd.f32 %v655, %v807
        %v810 = vadd.f32 %v656, %v808
        %s811 = sld [smem:[#allocation5 + $0x180]]
        %s812 = sld [smem:[#allocation5 + $0x181]]
        %s813 = sld [smem:[#allocation5 + $0x182]]
        %v814 = vstv %s811
        %v815 = vmul.f32 %v814, %v310
        %v816 = vmul.f32 %v814, %v311
        %v817 = vstv %s812
        %v818 = vmul.f32 %v817, %v313
        %v819 = vmul.f32 %v817, %v314
        %v820 = vadd.f32 %v815, %v818
        %v821 = vadd.f32 %v816, %v819
        %v822 = vstv %s813
        %v823 = vmul.f32 %v822, %v316
        %v824 = vmul.f32 %v822, %v317
        %v825 = vadd.f32 %v820, %v823
        %v826 = vadd.f32 %v821, %v824
        %v827 = vmul.f32 %v814, %v313
        %v828 = vmul.f32 %v814, %v314
        %v829 = vmul.f32 %v817, %v316
        %v830 = vmul.f32 %v817, %v317
        %v831 = vadd.f32 %v827, %v829
        %v832 = vadd.f32 %v828, %v830
        %v833 = vmul.f32 %v822, %v319
        %v834 = vmul.f32 %v822, %v320
        %v835 = vadd.f32 %v831, %v833
        %v836 = vadd.f32 %v832, %v834
        %v837 = vmax.f32 %v825, %v835
        %v838 = vmax.f32 %v826, %v836
        %v839 = vmul.f32 %v814, %v316
        %v840 = vmul.f32 %v814, %v317
        %v841 = vmul.f32 %v817, %v319
        %v842 = vmul.f32 %v817, %v320
        %v843 = vadd.f32 %v839, %v841
        %v844 = vadd.f32 %v840, %v842
        %v845 = vmul.f32 %v822, %v322
        %v846 = vmul.f32 %v822, %v323
        %v847 = vadd.f32 %v843, %v845
        %v848 = vadd.f32 %v844, %v846
        %v849 = vmax.f32 %v837, %v847
        %v850 = vmax.f32 %v838, %v848
        %v851 = vmul.f32 %v814, %v319
        %v852 = vmul.f32 %v814, %v320
        %v853 = vmul.f32 %v817, %v322
        %v854 = vmul.f32 %v817, %v323
        %v855 = vadd.f32 %v851, %v853
        %v856 = vadd.f32 %v852, %v854
        %v857 = vmul.f32 %v822, %v325
        %v858 = vmul.f32 %v822, %v326
        %v859 = vadd.f32 %v855, %v857
        %v860 = vadd.f32 %v856, %v858
        %v861 = vmax.f32 %v849, %v859
        %v862 = vmax.f32 %v850, %v860
        %v863 = vmul.f32 %v814, %v322
        %v864 = vmul.f32 %v814, %v323
        %v865 = vmul.f32 %v817, %v325
        %v866 = vmul.f32 %v817, %v326
        %v867 = vadd.f32 %v863, %v865
        %v868 = vadd.f32 %v864, %v866
        %v869 = vmul.f32 %v822, %v328
        %v870 = vmul.f32 %v822, %v329
        %v871 = vadd.f32 %v867, %v869
        %v872 = vadd.f32 %v868, %v870
        %v873 = vmax.f32 %v861, %v871
        %v874 = vmax.f32 %v862, %v872
        %v875 = vmul.f32 %v814, %v325
        %v876 = vmul.f32 %v814, %v326
        %v877 = vmul.f32 %v817, %v328
        %v878 = vmul.f32 %v817, %v329
        %v879 = vadd.f32 %v875, %v877
        %v880 = vadd.f32 %v876, %v878
        %v881 = vmul.f32 %v822, %v331
        %v882 = vmul.f32 %v822, %v332
        %v883 = vadd.f32 %v879, %v881
        %v884 = vadd.f32 %v880, %v882
        %v885 = vmax.f32 %v873, %v883
        %v886 = vmax.f32 %v874, %v884
        %v887 = vmul.f32 %v814, %v328
        %v888 = vmul.f32 %v814, %v329
        %v889 = vmul.f32 %v817, %v331
        %v890 = vmul.f32 %v817, %v332
        %v891 = vadd.f32 %v887, %v889
        %v892 = vadd.f32 %v888, %v890
        %v893 = vmul.f32 %v822, %v334
        %v894 = vmul.f32 %v822, %v335
        %v895 = vadd.f32 %v891, %v893
        %v896 = vadd.f32 %v892, %v894
        %v897 = vmax.f32 %v885, %v895
        %v898 = vmax.f32 %v886, %v896
        %v899 = vmul.f32 %v814, %v331
        %v900 = vmul.f32 %v814, %v332
        %v901 = vmul.f32 %v817, %v334
        %v902 = vmul.f32 %v817, %v335
        %v903 = vadd.f32 %v899, %v901
        %v904 = vadd.f32 %v900, %v902
        %v905 = vmul.f32 %v822, %v337
        %v906 = vmul.f32 %v822, %v338
        %v907 = vadd.f32 %v903, %v905
        %v908 = vadd.f32 %v904, %v906
        %v909 = vmax.f32 %v897, %v907
        %v910 = vmax.f32 %v898, %v908
        %v911 = vmul.f32 %v814, %v334
        %v912 = vmul.f32 %v814, %v335
        %v913 = vmul.f32 %v817, %v337
        %v914 = vmul.f32 %v817, %v338
        %v915 = vadd.f32 %v911, %v913
        %v916 = vadd.f32 %v912, %v914
        %v917 = vmul.f32 %v822, %v340
        %v918 = vmul.f32 %v822, %v341
        %v919 = vadd.f32 %v915, %v917
        %v920 = vadd.f32 %v916, %v918
        %v921 = vmax.f32 %v909, %v919
        %v922 = vmax.f32 %v910, %v920
        %v923 = vmul.f32 %v814, %v337
        %v924 = vmul.f32 %v814, %v338
        %v925 = vmul.f32 %v817, %v340
        %v926 = vmul.f32 %v817, %v341
        %v927 = vadd.f32 %v923, %v925
        %v928 = vadd.f32 %v924, %v926
        %v929 = vmul.f32 %v822, %v343
        %v930 = vmul.f32 %v822, %v344
        %v931 = vadd.f32 %v927, %v929
        %v932 = vadd.f32 %v928, %v930
        %v933 = vmax.f32 %v921, %v931
        %v934 = vmax.f32 %v922, %v932
        %s935 = sld [smem:[#allocation6 + $0x3]]
        %v936 = vstv %s935
        %v937 = vadd.f32 %v933, %v936
        %v938 = vadd.f32 %v934, %v936
        %v939 = vmax.f32 %v937, 0.0
        %v940 = vmax.f32 %v938, 0.0
        %v941 = vlaneseq
        %v942 = vshrl.u32 %v941, 7
        %v943 = vsub.s32 3, %v942
        %v944 = vrot.slane %v345, %v943
        %v945 = vlaneseq
        %v946 = vshrl.u32 %v945, 7
        %v947 = vsub.s32 3, %v946
        %v948 = vrot.slane %v346, %v947
        %v949 = vmul.f32 %v939, %v944
        %v950 = vmul.f32 %v940, %v948
        %v951 = vadd.f32 %v797, %v949
        %v952 = vadd.f32 %v798, %v950
        %v953 = vlaneseq
        %v954 = vshrl.u32 %v953, 7
        %v955 = vsub.s32 3, %v954
        %v956 = vrot.slane %v347, %v955
        %v957 = vlaneseq
        %v958 = vshrl.u32 %v957, 7
        %v959 = vsub.s32 3, %v958
        %v960 = vrot.slane %v348, %v959
        %v961 = vmul.f32 %v939, %v956
        %v962 = vmul.f32 %v940, %v960
        %v963 = vadd.f32 %v809, %v961
        %v964 = vadd.f32 %v810, %v962
        %s965 = sld [smem:[#allocation5 + $0x200]]
        %s966 = sld [smem:[#allocation5 + $0x201]]
        %s967 = sld [smem:[#allocation5 + $0x202]]
        %v968 = vstv %s965
        %v969 = vmul.f32 %v968, %v310
        %v970 = vmul.f32 %v968, %v311
        %v971 = vstv %s966
        %v972 = vmul.f32 %v971, %v313
        %v973 = vmul.f32 %v971, %v314
        %v974 = vadd.f32 %v969, %v972
        %v975 = vadd.f32 %v970, %v973
        %v976 = vstv %s967
        %v977 = vmul.f32 %v976, %v316
        %v978 = vmul.f32 %v976, %v317
        %v979 = vadd.f32 %v974, %v977
        %v980 = vadd.f32 %v975, %v978
        %v981 = vmul.f32 %v968, %v313
        %v982 = vmul.f32 %v968, %v314
        %v983 = vmul.f32 %v971, %v316
        %v984 = vmul.f32 %v971, %v317
        %v985 = vadd.f32 %v981, %v983
        %v986 = vadd.f32 %v982, %v984
        %v987 = vmul.f32 %v976, %v319
        %v988 = vmul.f32 %v976, %v320
        %v989 = vadd.f32 %v985, %v987
        %v990 = vadd.f32 %v986, %v988
        %v991 = vmax.f32 %v979, %v989
        %v992 = vmax.f32 %v980, %v990
        %v993 = vmul.f32 %v968, %v316
        %v994 = vmul.f32 %v968, %v317
        %v995 = vmul.f32 %v971, %v319
        %v996 = vmul.f32 %v971, %v320
        %v997 = vadd.f32 %v993, %v995
        %v998 = vadd.f32 %v994, %v996
        %v999 = vmul.f32 %v976, %v322
        %v1000 = vmul.f32 %v976, %v323
        %v1001 = vadd.f32 %v997, %v999
        %v1002 = vadd.f32 %v998, %v1000
        %v1003 = vmax.f32 %v991, %v1001
        %v1004 = vmax.f32 %v992, %v1002
        %v1005 = vmul.f32 %v968, %v319
        %v1006 = vmul.f32 %v968, %v320
        %v1007 = vmul.f32 %v971, %v322
        %v1008 = vmul.f32 %v971, %v323
        %v1009 = vadd.f32 %v1005, %v1007
        %v1010 = vadd.f32 %v1006, %v1008
        %v1011 = vmul.f32 %v976, %v325
        %v1012 = vmul.f32 %v976, %v326
        %v1013 = vadd.f32 %v1009, %v1011
        %v1014 = vadd.f32 %v1010, %v1012
        %v1015 = vmax.f32 %v1003, %v1013
        %v1016 = vmax.f32 %v1004, %v1014
        %v1017 = vmul.f32 %v968, %v322
        %v1018 = vmul.f32 %v968, %v323
        %v1019 = vmul.f32 %v971, %v325
        %v1020 = vmul.f32 %v971, %v326
        %v1021 = vadd.f32 %v1017, %v1019
        %v1022 = vadd.f32 %v1018, %v1020
        %v1023 = vmul.f32 %v976, %v328
        %v1024 = vmul.f32 %v976, %v329
        %v1025 = vadd.f32 %v1021, %v1023
        %v1026 = vadd.f32 %v1022, %v1024
        %v1027 = vmax.f32 %v1015, %v1025
        %v1028 = vmax.f32 %v1016, %v1026
        %v1029 = vmul.f32 %v968, %v325
        %v1030 = vmul.f32 %v968, %v326
        %v1031 = vmul.f32 %v971, %v328
        %v1032 = vmul.f32 %v971, %v329
        %v1033 = vadd.f32 %v1029, %v1031
        %v1034 = vadd.f32 %v1030, %v1032
        %v1035 = vmul.f32 %v976, %v331
        %v1036 = vmul.f32 %v976, %v332
        %v1037 = vadd.f32 %v1033, %v1035
        %v1038 = vadd.f32 %v1034, %v1036
        %v1039 = vmax.f32 %v1027, %v1037
        %v1040 = vmax.f32 %v1028, %v1038
        %v1041 = vmul.f32 %v968, %v328
        %v1042 = vmul.f32 %v968, %v329
        %v1043 = vmul.f32 %v971, %v331
        %v1044 = vmul.f32 %v971, %v332
        %v1045 = vadd.f32 %v1041, %v1043
        %v1046 = vadd.f32 %v1042, %v1044
        %v1047 = vmul.f32 %v976, %v334
        %v1048 = vmul.f32 %v976, %v335
        %v1049 = vadd.f32 %v1045, %v1047
        %v1050 = vadd.f32 %v1046, %v1048
        %v1051 = vmax.f32 %v1039, %v1049
        %v1052 = vmax.f32 %v1040, %v1050
        %v1053 = vmul.f32 %v968, %v331
        %v1054 = vmul.f32 %v968, %v332
        %v1055 = vmul.f32 %v971, %v334
        %v1056 = vmul.f32 %v971, %v335
        %v1057 = vadd.f32 %v1053, %v1055
        %v1058 = vadd.f32 %v1054, %v1056
        %v1059 = vmul.f32 %v976, %v337
        %v1060 = vmul.f32 %v976, %v338
        %v1061 = vadd.f32 %v1057, %v1059
        %v1062 = vadd.f32 %v1058, %v1060
        %v1063 = vmax.f32 %v1051, %v1061
        %v1064 = vmax.f32 %v1052, %v1062
        %v1065 = vmul.f32 %v968, %v334
        %v1066 = vmul.f32 %v968, %v335
        %v1067 = vmul.f32 %v971, %v337
        %v1068 = vmul.f32 %v971, %v338
        %v1069 = vadd.f32 %v1065, %v1067
        %v1070 = vadd.f32 %v1066, %v1068
        %v1071 = vmul.f32 %v976, %v340
        %v1072 = vmul.f32 %v976, %v341
        %v1073 = vadd.f32 %v1069, %v1071
        %v1074 = vadd.f32 %v1070, %v1072
        %v1075 = vmax.f32 %v1063, %v1073
        %v1076 = vmax.f32 %v1064, %v1074
        %v1077 = vmul.f32 %v968, %v337
        %v1078 = vmul.f32 %v968, %v338
        %v1079 = vmul.f32 %v971, %v340
        %v1080 = vmul.f32 %v971, %v341
        %v1081 = vadd.f32 %v1077, %v1079
        %v1082 = vadd.f32 %v1078, %v1080
        %v1083 = vmul.f32 %v976, %v343
        %v1084 = vmul.f32 %v976, %v344
        %v1085 = vadd.f32 %v1081, %v1083
        %v1086 = vadd.f32 %v1082, %v1084
        %v1087 = vmax.f32 %v1075, %v1085
        %v1088 = vmax.f32 %v1076, %v1086
        %s1089 = sld [smem:[#allocation6 + $0x4]]
        %v1090 = vstv %s1089
        %v1091 = vadd.f32 %v1087, %v1090
        %v1092 = vadd.f32 %v1088, %v1090
        %v1093 = vmax.f32 %v1091, 0.0
        %v1094 = vmax.f32 %v1092, 0.0
        %v1095 = vlaneseq
        %v1096 = vshrl.u32 %v1095, 7
        %v1097 = vsub.s32 4, %v1096
        %v1098 = vrot.slane %v345, %v1097
        %v1099 = vlaneseq
        %v1100 = vshrl.u32 %v1099, 7
        %v1101 = vsub.s32 4, %v1100
        %v1102 = vrot.slane %v346, %v1101
        %v1103 = vmul.f32 %v1093, %v1098
        %v1104 = vmul.f32 %v1094, %v1102
        %v1105 = vadd.f32 %v951, %v1103
        %v1106 = vadd.f32 %v952, %v1104
        %v1107 = vlaneseq
        %v1108 = vshrl.u32 %v1107, 7
        %v1109 = vsub.s32 4, %v1108
        %v1110 = vrot.slane %v347, %v1109
        %v1111 = vlaneseq
        %v1112 = vshrl.u32 %v1111, 7
        %v1113 = vsub.s32 4, %v1112
        %v1114 = vrot.slane %v348, %v1113
        %v1115 = vmul.f32 %v1093, %v1110
        %v1116 = vmul.f32 %v1094, %v1114
        %v1117 = vadd.f32 %v963, %v1115
        %v1118 = vadd.f32 %v964, %v1116
        %vm1119 = vcmask 179200
        %v1120 = vsel %vm1119, %v1106, 0.0
        %v1121 = vadd.f32 %v1105, %v1120
        %1122 = vadd.xlane.f32.xlu0 %v1121
        %v1123 = vpop.xlane.xlu0 %1122
        %v1124 = vsel %vm1119, %v1118, 0.0
        %v1125 = vadd.f32 %v1117, %v1124
        %1126 = vadd.xlane.f32.xlu0 %v1125
        %v1127 = vpop.xlane.xlu0 %1126
        %v1128 = vlaneseq
        %v1129 = vand.u32 %v1128, 127
        %vm1130 = vcmp.eq.s32.totalorder %v1129, 0
        %v1131 = vsel %vm1130, %v1123, %v1127
        %v1132 = vld [vmem:[%s5] sm:$0x1]
        %v1134 = vlaneseq
        %v1135 = vshrl.u32 %v1134, 7
        %v1136 = vsub.s32 0, %v1135
        %v1137 = vrot.slane %v1132, %v1136
        %v1139 = vadd.f32 %v1131, %v1137
        %vm1140 = vcmask 15360
        %v1141 = vsel %vm1140, %v1139, -inf
        %1142 = vmax.xlane.f32.xlu0 %v1141
        %v1143 = vpop.xlane.xlu0 %1142
        %v1144 = vsub.f32 %v1139, %v1143
        %v1145 = vmul.f32 %v1144, 1.442695
        %v1146 = vpow.pop %v1145
        %v1147 = vsel %vm1140, %v1146, 0.0
        %1148 = vadd.xlane.f32.xlu0 %v1147
        %v1149 = vpop.xlane.xlu0 %1148
        %v1150 = vrcp.pop %v1149
        %v1151 = vmul.f32 %v1146, %v1150
        %1152 = vst.msk [vmem:[%s309] sm:$0xff] %vm1140, %v1151
        %p1153 = scmp.lt.s32.totalorder %s23, 1
        %s1154 = scalar_select %p1153, %s23, 1
        %s1155 = smul.addr %s1154, 8
        %s1156 = scalar_lea.vmem %s6, %s1155
        // Predicated region
        $region61: #{tpu_custom_call.1} parent=43 // pred_check
          %p1157 = pneg %p172
        $region62: #{tpu_custom_call.1} parent=43 // pred_check_branch
          %1159 = sbr.rel (%p1157) target = $region64
        $region63: #{tpu_custom_call.1} parent=43 // pred_region
          _
        $region64: #{tpu_custom_call.1} parent=43 // pred_fallthru
          _
      $region44: #{tpu_custom_call.1} parent=5 // pred_fallthru
        _
      %p1160 = scmp.le.s32.totalorder 2, %s18
      // Predicated region
      $region65: #{tpu_custom_call.1} parent=5 // pred_check
        %p1161 = pneg %p1160
      $region66: #{tpu_custom_call.1} parent=5 // pred_check_branch
        %1163 = sbr.rel (%p1161) target = $region68
      $region67: #{tpu_custom_call.1} parent=5 // pred_region
        %s1164 = ssub.s32 %s18, 2
        // Predicated region
        $region69: #{tpu_custom_call.1} parent=67 // pred_check
          %p1165 = pneg %p178
        $region70: #{tpu_custom_call.1} parent=67 // pred_check_branch
          %1167 = sbr.rel (%p1165) target = $region72
        $region71: #{tpu_custom_call.1} parent=67 // pred_region
          %p1168 = scmp.lt.s32.totalorder %s24, 1
          %s1169 = scalar_select %p1168, %s24, 1
          %s1170 = smul.addr %s1169, 8
          %s1171 = scalar_lea.vmem %s6, %s1170
        $region72: #{tpu_custom_call.1} parent=67 // pred_fallthru
          _
      $region68: #{tpu_custom_call.1} parent=5 // pred_fallthru
        _
    $region6: #{tpu_custom_call.1} parent=1 // loop_footer
      %s22 = sadd.s32 1, %s18
    $region7: #{tpu_custom_call.1} parent=1 // loop_footer_branch
      %17 = sbr.rel target = $region3
    $region8: #{tpu_custom_call.1} parent=1 // loop_exit
      _
    %1172 = vsyncpa [#allocation3], 1
    %s1173 = scalar_lea.sflag [#allocation3], 1
    %1174 = vsyncpa %s1173, 1
    %1175 = vsyncpa [#allocation9], 1
    %1176 = vsyncpa [#allocation4], 1
    %s1177 = scalar_lea.sflag [#allocation4], 1
    %1178 = vsyncpa %s1177, 1
    %1179 = vsyncpa [#allocation7], 1

</llo_original>
